<compile_context>
chip_gen: v7x
topology: tpu7x:2x2x1
jax: 0.10.0
libtpu: 0.0.40
codegen_flags: <defaults>
</compile_context>

<pallas_src>
import jax
import jax.numpy as jnp
from jax.experimental import pallas as pl
from jax.experimental.pallas import tpu as pltpu


# ----------------------------------------------------------------------------- helpers

def _round_up(x, m):
    return (x + m - 1) // m * m


def _cdiv(a, b):
    return (a + b - 1) // b


def _choose_tile_b(batch, max_tile=512):
    """Largest batch tile that keeps the 'parallel' grid even (v7x: 2 TCs)."""
    b8 = _round_up(batch, 8)
    if b8 <= max_tile:
        if b8 <= 16:
            return b8                       # tiny batch: one step is cheapest
        return _round_up(b8, 16) // 2       # exactly 2 steps, multiple of 8
    steps = _cdiv(b8, max_tile)
    if steps % 2:
        steps += 1                          # keep the grid even for v7x megacore
    return _round_up(_cdiv(b8, steps), 8)


# ----------------------------------------------------------------------------- kernel

def make_actor_critic_kernel(h2, out_pad):
    """Fused actor+critic 3-layer MLP on one (TILE_B, IN) batch tile.

    Weights may be f32 or bf16; matmul inputs are in the weight dtype (the
    wrapper pre-casts the state), accumulation / bias / ReLU stay f32.
    """

    def kernel(x_ref, w1_ref, w2_ref, w3_ref, b_ref, out_ref):
        wdt = w1_ref.dtype
        x = x_ref[...]
        if x.dtype != wdt:                  # no-op when the wrapper pre-casts
            x = x.astype(wdt)
        b = b_ref[...]                      # (3, bias_w) f32, resident

        h = jnp.dot(x, w1_ref[...], preferred_element_type=jnp.float32) + b[0:1, :h2]
        h = jnp.maximum(h, 0.0)             # relu (dropout = identity)

        h = jnp.dot(h.astype(wdt), w2_ref[...], preferred_element_type=jnp.float32) + b[1:2, :h2]
        h = jnp.maximum(h, 0.0)             # relu (dropout = identity)

        out_ref[...] = (
            jnp.dot(h.astype(wdt), w3_ref[...], preferred_element_type=jnp.float32)
            + b[2:3, :out_pad]
        )

    return kernel


# ----------------------------------------------------------------------------- packing

def pack_params(p, action_dim, *, weight_dtype=jnp.bfloat16, lane=128):
    """Fuse the six nn.Linear layers into three lane-dense matrices + one bias pack.

    Fused hidden axis: [actor hidden | critic hidden | zero pad]  (width h2).
    Fused output axis: [action (A)   | value (1)     | zero pad]  (width out_pad).
    Off-diagonal blocks of W2 are explicitly zero so actor/critic never mix.
    Biases stay f32 (keeps v5e's VPU on its f32 path); weights default to bf16
    (MXU-native on v5e/v6e/v7x, halves resident VMEM + weight DMA).
    """
    in_f, hid = p["aw1"].shape
    h2 = _round_up(2 * hid, lane)               # fused hidden width (lane-dense)
    out_pad = _round_up(action_dim + 1, lane)   # fused output width (lane-dense)
    bias_w = max(h2, out_pad)

    w1 = jnp.zeros((in_f, h2), jnp.float32)
    w1 = w1.at[:, :hid].set(p["aw1"]).at[:, hid:2 * hid].set(p["cw1"])

    w2 = jnp.zeros((h2, h2), jnp.float32)       # block-diagonal
    w2 = w2.at[:hid, :hid].set(p["aw2"]).at[hid:2 * hid, hid:2 * hid].set(p["cw2"])

    w3 = jnp.zeros((h2, out_pad), jnp.float32)
    w3 = w3.at[:hid, :action_dim].set(p["aw3"])
    w3 = w3.at[hid:2 * hid, action_dim:action_dim + 1].set(p["cw3"])

    b = jnp.zeros((3, bias_w), jnp.float32)     # one resident bias pack (f32)
    b = b.at[0, :hid].set(p["ab1"][0]).at[0, hid:2 * hid].set(p["cb1"][0])
    b = b.at[1, :hid].set(p["ab2"][0]).at[1, hid:2 * hid].set(p["cb2"][0])
    b = b.at[2, :action_dim].set(p["ab3"][0]).at[2, action_dim:action_dim + 1].set(p["cb3"][0])

    return dict(
        w1=w1.astype(weight_dtype),
        w2=w2.astype(weight_dtype),
        w3=w3.astype(weight_dtype),
        b=b,
    )


# ----------------------------------------------------------------------------- wrapper

def actor_critic_forward(state, packed, action_dim, *, tile_b=None, return_packed=False):
    """state: (B, in_features) f32 (or bf16).  packed: output of pack_params.

    Returns (action_pred (B, action_dim), value_pred (B, 1)), or the packed
    lane-dense (B, out_pad) slab when return_packed=True.
    """
    B, F = state.shape
    w1, w2, w3, biases = packed["w1"], packed["w2"], packed["w3"], packed["b"]
    h2 = w2.shape[1]
    out_pad = w3.shape[1]
    wdt = w1.dtype

    # bf16 weights => bf16 state: halves the only recurring per-step input DMA
    # and removes the in-kernel convert (f32 weights keep an f32 state).
    if state.dtype != wdt:
        state = state.astype(wdt)

    if tile_b is None:
        tile_b = _choose_tile_b(B)
    tile_b = min(tile_b, _round_up(B, 8))       # never tile bigger than the padded batch
    b_pad = _round_up(B, tile_b)
    if b_pad != B:
        state = jnp.pad(state, ((0, b_pad - B), (0, 0)))
    grid = (b_pad // tile_b,)

    # Advisory cost for XLA scheduling around the (microseconds-long) custom call.
    flops = 2 * b_pad * (F * h2 + h2 * h2 + h2 * out_pad)
    bytes_accessed = (
        state.size * state.dtype.itemsize
        + w1.size * w1.dtype.itemsize
        + w2.size * w2.dtype.itemsize
        + w3.size * w3.dtype.itemsize
        + biases.size * biases.dtype.itemsize
        + b_pad * out_pad * 4
    )
    cost = pl.CostEstimate(flops=flops, transcendentals=0, bytes_accessed=bytes_accessed)

    def build(single_buffer_resident):
        def resident(arr):                      # whole array, same block every grid step
            if single_buffer_resident:
                return pl.BlockSpec(arr.shape, lambda i: (0, 0),
                                    pipeline_mode=pl.Buffered(1))
            return pl.BlockSpec(arr.shape, lambda i: (0, 0))

        return pl.pallas_call(
            make_actor_critic_kernel(h2, out_pad),
            out_shape=jax.ShapeDtypeStruct((b_pad, out_pad), jnp.float32),
            grid=grid,
            in_specs=[
                pl.BlockSpec((tile_b, F), lambda i: (i, 0)),     # batch tile (pipelined)
                resident(w1), resident(w2), resident(w3), resident(biases),
            ],
            out_specs=pl.BlockSpec((tile_b, out_pad), lambda i: (i, 0)),
            compiler_params=pltpu.CompilerParams(
                dimension_semantics=("parallel",),   # v7x: 2 TCs split the batch grid
                vmem_limit_bytes=32 * 1024 * 1024,   # explicit headroom (safe on all gens)
            ),
            cost_estimate=cost,
        )(state, w1, w2, w3, biases)

    try:
        out = build(True)                       # single-buffered resident weights
    except Exception:                           # jax without Buffered(1) support -> default
        out = build(False)

    if return_packed:
        return out[:B]                          # lane-dense [action | value | 0-pad]
    action_pred = out[:B, :action_dim]
    value_pred = out[:B, action_dim:action_dim + 1]
    return action_pred, value_pred


# ----------------------------------------------------------------------------- init / ref

def init_linear(key, fan_in, fan_out):
    """PyTorch-style init: U(-1/sqrt(fan_in), 1/sqrt(fan_in)) for W and b."""
    kw, kb = jax.random.split(key)
    bound = 1.0 / jnp.sqrt(jnp.float32(fan_in))
    w = jax.random.uniform(kw, (fan_in, fan_out), jnp.float32, -bound, bound)
    b = jax.random.uniform(kb, (1, fan_out), jnp.float32, -bound, bound)
    return w, b


def make_params(key, in_features, hidden, action_dim):
    keys = jax.random.split(key, 6)
    aw1, ab1 = init_linear(keys[0], in_features, hidden)
    aw2, ab2 = init_linear(keys[1], hidden, hidden)
    aw3, ab3 = init_linear(keys[2], hidden, action_dim)
    cw1, cb1 = init_linear(keys[3], in_features, hidden)
    cw2, cb2 = init_linear(keys[4], hidden, hidden)
    cw3, cb3 = init_linear(keys[5], hidden, 1)
    return dict(
        aw1=aw1, ab1=ab1, aw2=aw2, ab2=ab2, aw3=aw3, ab3=ab3,
        cw1=cw1, cb1=cb1, cw2=cw2, cb2=cb2, cw3=cw3, cb3=cb3,
    )


def reference_forward(state, p):
    relu = lambda x: jnp.maximum(x, 0.0)
    a = relu(state @ p["aw1"] + p["ab1"])
    a = relu(a @ p["aw2"] + p["ab2"])
    action = a @ p["aw3"] + p["ab3"]
    c = relu(state @ p["cw1"] + p["cb1"])
    c = relu(c @ p["cw2"] + p["cb2"])
    value = c @ p["cw3"] + p["cb3"]
    return action, value


# ----------------------------------------------------------------------------- main

if __name__ == "__main__":
    B, IN_FEATURES, HIDDEN, ACTION_DIM = 256, 32, 64, 4

    key = jax.random.PRNGKey(0)
    k_state, k_params = jax.random.split(key)

    state = jax.random.normal(k_state, (B, IN_FEATURES), jnp.float32)
    params = make_params(k_params, IN_FEATURES, HIDDEN, ACTION_DIM)
    ref_action, ref_value = reference_forward(state, params)

    # --- f32 weights: exact parity with the PyTorch/JAX reference --------------
    # auto tile: B=256 -> 2 even "parallel" grid steps of 128 (v7x-friendly).
    packed_f32 = pack_params(params, ACTION_DIM, weight_dtype=jnp.float32)
    action_pred, value_pred = actor_critic_forward(state, packed_f32, ACTION_DIM)
    jax.block_until_ready((action_pred, value_pred))

    assert action_pred.shape == (B, ACTION_DIM)
    assert value_pred.shape == (B, 1)
    assert jnp.allclose(action_pred, ref_action, atol=1e-5, rtol=1e-5)
    assert jnp.allclose(value_pred, ref_value, atol=1e-5, rtol=1e-5)

    # --- bf16 weights (default path on all generations), f32 accumulate --------
    packed_bf16 = pack_params(params, ACTION_DIM)     # weight_dtype defaults to bf16
    action_bf16, value_bf16 = actor_critic_forward(state, packed_bf16, ACTION_DIM)
    jax.block_until_ready((action_bf16, value_bf16))
    assert action_bf16.shape == (B, ACTION_DIM)
    assert value_bf16.shape == (B, 1)
    assert float(jnp.max(jnp.abs(action_bf16.astype(jnp.float32) - ref_action))) < 0.1
    assert float(jnp.max(jnp.abs(value_bf16.astype(jnp.float32) - ref_value))) < 0.1

    # --- packed-slab consumer path (skips the two output slices) ---------------
    slab = actor_critic_forward(state, packed_bf16, ACTION_DIM, return_packed=True)
    jax.block_until_ready(slab)
    assert slab.shape[0] == B and slab.shape[1] >= ACTION_DIM + 1

    print("KERNEL_OK")
</pallas_src>

<mosaic_0001>
module attributes {stable_mosaic.version = 11 : i64} {
  func.func @kernel(%arg0: i32, %arg1: memref<128x32xf32, #tpu.memory_space<vmem>>, %arg2: memref<32x128xf32, #tpu.memory_space<vmem>>, %arg3: memref<128x128xf32, #tpu.memory_space<vmem>>, %arg4: memref<128x128xf32, #tpu.memory_space<vmem>>, %arg5: memref<3x128xf32, #tpu.memory_space<vmem>>, %arg6: memref<128x128xf32, #tpu.memory_space<vmem>>) attributes {dimension_semantics = [#tpu.dimension_semantics<parallel>], iteration_bounds = array<i64: 2>, scalar_prefetch = 0 : i64, scratch_operands = 0 : i64, tpu.core_type = #tpu.core_type<tc>, window_params = [{transform_indices = @transform_0, window_bounds = array<i64: 128, 32>}, {pipeline_mode = #tpu.pipeline_mode<synchronous>, transform_indices = @transform_1, window_bounds = array<i64: 32, 128>}, {pipeline_mode = #tpu.pipeline_mode<synchronous>, transform_indices = @transform_2, window_bounds = array<i64: 128, 128>}, {pipeline_mode = #tpu.pipeline_mode<synchronous>, transform_indices = @transform_3, window_bounds = array<i64: 128, 128>}, {pipeline_mode = #tpu.pipeline_mode<synchronous>, transform_indices = @transform_4, window_bounds = array<i64: 3, 128>}, {transform_indices = @transform_5, window_bounds = array<i64: 128, 128>}]} {
    %c0 = arith.constant 0 : index
    %c0_0 = arith.constant 0 : index
    %0 = vector.load %arg1[%c0, %c0_0] : memref<128x32xf32, #tpu.memory_space<vmem>>, vector<128x32xf32>
    %c0_1 = arith.constant 0 : index
    %c0_2 = arith.constant 0 : index
    %1 = vector.load %arg5[%c0_1, %c0_2] : memref<3x128xf32, #tpu.memory_space<vmem>>, vector<3x128xf32>
    %c0_3 = arith.constant 0 : index
    %c0_4 = arith.constant 0 : index
    %2 = vector.load %arg2[%c0_3, %c0_4] : memref<32x128xf32, #tpu.memory_space<vmem>>, vector<32x128xf32>
    %cst = arith.constant dense<0.000000e+00> : vector<128x128xf32>
    %3 = tpu.matmul %0, %2, %cst {dimension_numbers = #tpu.dot_dimension_numbers<[1], [0], [0], [1], [0, 0, 1, 1], [], []>} : vector<128x32xf32>, vector<32x128xf32>, vector<128x128xf32> -> vector<128x128xf32>
    %4 = vector.extract_strided_slice %1 {offsets = [0, 0], sizes = [1, 128], strides = [1, 1]} : vector<3x128xf32> to vector<1x128xf32>
    %5 = vector.broadcast %4 : vector<1x128xf32> to vector<128x128xf32>
    %6 = arith.addf %3, %5 : vector<128x128xf32>
    %cst_5 = arith.constant 0.000000e+00 : f32
    %7 = vector.broadcast %cst_5 : f32 to vector<128x128xf32>
    %8 = arith.maximumf %6, %7 : vector<128x128xf32>
    %c0_6 = arith.constant 0 : index
    %c0_7 = arith.constant 0 : index
    %9 = vector.load %arg3[%c0_6, %c0_7] : memref<128x128xf32, #tpu.memory_space<vmem>>, vector<128x128xf32>
    %cst_8 = arith.constant dense<0.000000e+00> : vector<128x128xf32>
    %10 = tpu.matmul %8, %9, %cst_8 {dimension_numbers = #tpu.dot_dimension_numbers<[1], [0], [0], [1], [0, 0, 1, 1], [], []>} : vector<128x128xf32>, vector<128x128xf32>, vector<128x128xf32> -> vector<128x128xf32>
    %11 = vector.extract_strided_slice %1 {offsets = [1, 0], sizes = [1, 128], strides = [1, 1]} : vector<3x128xf32> to vector<1x128xf32>
    %12 = vector.broadcast %11 : vector<1x128xf32> to vector<128x128xf32>
    %13 = arith.addf %10, %12 : vector<128x128xf32>
    %cst_9 = arith.constant 0.000000e+00 : f32
    %14 = vector.broadcast %cst_9 : f32 to vector<128x128xf32>
    %15 = arith.maximumf %13, %14 : vector<128x128xf32>
    %c0_10 = arith.constant 0 : index
    %c0_11 = arith.constant 0 : index
    %16 = vector.load %arg4[%c0_10, %c0_11] : memref<128x128xf32, #tpu.memory_space<vmem>>, vector<128x128xf32>
    %cst_12 = arith.constant dense<0.000000e+00> : vector<128x128xf32>
    %17 = tpu.matmul %15, %16, %cst_12 {dimension_numbers = #tpu.dot_dimension_numbers<[1], [0], [0], [1], [0, 0, 1, 1], [], []>} : vector<128x128xf32>, vector<128x128xf32>, vector<128x128xf32> -> vector<128x128xf32>
    %18 = vector.extract_strided_slice %1 {offsets = [2, 0], sizes = [1, 128], strides = [1, 1]} : vector<3x128xf32> to vector<1x128xf32>
    %19 = vector.broadcast %18 : vector<1x128xf32> to vector<128x128xf32>
    %20 = arith.addf %17, %19 : vector<128x128xf32>
    %c0_13 = arith.constant 0 : index
    %c0_14 = arith.constant 0 : index
    %21 = vector.load %arg6[%c0_13, %c0_14] : memref<128x128xf32, #tpu.memory_space<vmem>>, vector<128x128xf32>
    tpu.vector_store %arg6[%c0_13, %c0_14], %20 {strides = array<i32>} : memref<128x128xf32, #tpu.memory_space<vmem>>, vector<128x128xf32>,
    return
  }
  func.func @transform_0(%arg0: i32) -> (i32, i32) {
    %c0_i32 = arith.constant 0 : i32
    %c0_i32_0 = arith.constant 0 : i32
    return %arg0, %c0_i32 : i32, i32
  }
  func.func @transform_1(%arg0: i32) -> (i32, i32) {
    %c0_i32 = arith.constant 0 : i32
    %c0_i32_0 = arith.constant 0 : i32
    %c0_i32_1 = arith.constant 0 : i32
    return %c0_i32, %c0_i32_0 : i32, i32
  }
  func.func @transform_2(%arg0: i32) -> (i32, i32) {
    %c0_i32 = arith.constant 0 : i32
    %c0_i32_0 = arith.constant 0 : i32
    %c0_i32_1 = arith.constant 0 : i32
    return %c0_i32, %c0_i32_0 : i32, i32
  }
  func.func @transform_3(%arg0: i32) -> (i32, i32) {
    %c0_i32 = arith.constant 0 : i32
    %c0_i32_0 = arith.constant 0 : i32
    %c0_i32_1 = arith.constant 0 : i32
    return %c0_i32, %c0_i32_0 : i32, i32
  }
  func.func @transform_4(%arg0: i32) -> (i32, i32) {
    %c0_i32 = arith.constant 0 : i32
    %c0_i32_0 = arith.constant 0 : i32
    %c0_i32_1 = arith.constant 0 : i32
    return %c0_i32, %c0_i32_0 : i32, i32
  }
  func.func @transform_5(%arg0: i32) -> (i32, i32) {
    %c0_i32 = arith.constant 0 : i32
    %c0_i32_0 = arith.constant 0 : i32
    return %arg0, %c0_i32 : i32, i32
  }
}

module attributes {stable_mosaic.version = 11 : i64} {
  func.func @kernel(%arg0: i32, %arg1: memref<128x32xf32, #tpu.memory_space<vmem>>, %arg2: memref<32x128xf32, #tpu.memory_space<vmem>>, %arg3: memref<128x128xf32, #tpu.memory_space<vmem>>, %arg4: memref<128x128xf32, #tpu.memory_space<vmem>>, %arg5: memref<3x128xf32, #tpu.memory_space<vmem>>, %arg6: memref<128x128xf32, #tpu.memory_space<vmem>>) attributes {dimension_semantics = [#tpu.dimension_semantics<parallel>], iteration_bounds = array<i64: 2>, scalar_prefetch = 0 : i64, scratch_operands = 0 : i64, tpu.core_type = #tpu.core_type<tc>, window_params = [{transform_indices = @transform_0, window_bounds = array<i64: 128, 32>}, {pipeline_mode = #tpu.pipeline_mode<synchronous>, transform_indices = @transform_1, window_bounds = array<i64: 32, 128>}, {pipeline_mode = #tpu.pipeline_mode<synchronous>, transform_indices = @transform_2, window_bounds = array<i64: 128, 128>}, {pipeline_mode = #tpu.pipeline_mode<synchronous>, transform_indices = @transform_3, window_bounds = array<i64: 128, 128>}, {pipeline_mode = #tpu.pipeline_mode<synchronous>, transform_indices = @transform_4, window_bounds = array<i64: 3, 128>}, {transform_indices = @transform_5, window_bounds = array<i64: 128, 128>}]} {
    %c0 = arith.constant 0 : index
    %c0_0 = arith.constant 0 : index
    %0 = vector.load %arg1[%c0, %c0_0] : memref<128x32xf32, #tpu.memory_space<vmem>>, vector<128x32xf32>
    %c0_1 = arith.constant 0 : index
    %c0_2 = arith.constant 0 : index
    %1 = vector.load %arg5[%c0_1, %c0_2] : memref<3x128xf32, #tpu.memory_space<vmem>>, vector<3x128xf32>
    %c0_3 = arith.constant 0 : index
    %c0_4 = arith.constant 0 : index
    %2 = vector.load %arg2[%c0_3, %c0_4] : memref<32x128xf32, #tpu.memory_space<vmem>>, vector<32x128xf32>
    %cst = arith.constant dense<0.000000e+00> : vector<128x128xf32>
    %3 = tpu.matmul %0, %2, %cst {dimension_numbers = #tpu.dot_dimension_numbers<[1], [0], [0], [1], [0, 0, 1, 1], [], []>} : vector<128x32xf32>, vector<32x128xf32>, vector<128x128xf32> -> vector<128x128xf32>
    %4 = vector.extract_strided_slice %1 {offsets = [0, 0], sizes = [1, 128], strides = [1, 1]} : vector<3x128xf32> to vector<1x128xf32>
    %5 = vector.broadcast %4 : vector<1x128xf32> to vector<128x128xf32>
    %6 = arith.addf %3, %5 : vector<128x128xf32>
    %cst_5 = arith.constant 0.000000e+00 : f32
    %7 = vector.broadcast %cst_5 : f32 to vector<128x128xf32>
    %8 = arith.maximumf %6, %7 : vector<128x128xf32>
    %c0_6 = arith.constant 0 : index
    %c0_7 = arith.constant 0 : index
    %9 = vector.load %arg3[%c0_6, %c0_7] : memref<128x128xf32, #tpu.memory_space<vmem>>, vector<128x128xf32>
    %cst_8 = arith.constant dense<0.000000e+00> : vector<128x128xf32>
    %10 = tpu.matmul %8, %9, %cst_8 {dimension_numbers = #tpu.dot_dimension_numbers<[1], [0], [0], [1], [0, 0, 1, 1], [], []>} : vector<128x128xf32>, vector<128x128xf32>, vector<128x128xf32> -> vector<128x128xf32>
    %11 = vector.extract_strided_slice %1 {offsets = [1, 0], sizes = [1, 128], strides = [1, 1]} : vector<3x128xf32> to vector<1x128xf32>
    %12 = vector.broadcast %11 : vector<1x128xf32> to vector<128x128xf32>
    %13 = arith.addf %10, %12 : vector<128x128xf32>
    %cst_9 = arith.constant 0.000000e+00 : f32
    %14 = vector.broadcast %cst_9 : f32 to vector<128x128xf32>
    %15 = arith.maximumf %13, %14 : vector<128x128xf32>
    %c0_10 = arith.constant 0 : index
    %c0_11 = arith.constant 0 : index
    %16 = vector.load %arg4[%c0_10, %c0_11] : memref<128x128xf32, #tpu.memory_space<vmem>>, vector<128x128xf32>
    %cst_12 = arith.constant dense<0.000000e+00> : vector<128x128xf32>
    %17 = tpu.matmul %15, %16, %cst_12 {dimension_numbers = #tpu.dot_dimension_numbers<[1], [0], [0], [1], [0, 0, 1, 1], [], []>} : vector<128x128xf32>, vector<128x128xf32>, vector<128x128xf32> -> vector<128x128xf32>
    %18 = vector.extract_strided_slice %1 {offsets = [2, 0], sizes = [1, 128], strides = [1, 1]} : vector<3x128xf32> to vector<1x128xf32>
    %19 = vector.broadcast %18 : vector<1x128xf32> to vector<128x128xf32>
    %20 = arith.addf %17, %19 : vector<128x128xf32>
    %c0_13 = arith.constant 0 : index
    %c0_14 = arith.constant 0 : index
    %21 = vector.load %arg6[%c0_13, %c0_14] : memref<128x128xf32, #tpu.memory_space<vmem>>, vector<128x128xf32>
    tpu.vector_store %arg6[%c0_13, %c0_14], %20 {strides = array<i32>} : memref<128x128xf32, #tpu.memory_space<vmem>>, vector<128x128xf32>,
    return
  }
  func.func @transform_0(%arg0: i32) -> (i32, i32) {
    %c0_i32 = arith.constant 0 : i32
    %c0_i32_0 = arith.constant 0 : i32
    return %arg0, %c0_i32 : i32, i32
  }
  func.func @transform_1(%arg0: i32) -> (i32, i32) {
    %c0_i32 = arith.constant 0 : i32
    %c0_i32_0 = arith.constant 0 : i32
    %c0_i32_1 = arith.constant 0 : i32
    return %c0_i32, %c0_i32_0 : i32, i32
  }
  func.func @transform_2(%arg0: i32) -> (i32, i32) {
    %c0_i32 = arith.constant 0 : i32
    %c0_i32_0 = arith.constant 0 : i32
    %c0_i32_1 = arith.constant 0 : i32
    return %c0_i32, %c0_i32_0 : i32, i32
  }
  func.func @transform_3(%arg0: i32) -> (i32, i32) {
    %c0_i32 = arith.constant 0 : i32
    %c0_i32_0 = arith.constant 0 : i32
    %c0_i32_1 = arith.constant 0 : i32
    return %c0_i32, %c0_i32_0 : i32, i32
  }
  func.func @transform_4(%arg0: i32) -> (i32, i32) {
    %c0_i32 = arith.constant 0 : i32
    %c0_i32_0 = arith.constant 0 : i32
    %c0_i32_1 = arith.constant 0 : i32
    return %c0_i32, %c0_i32_0 : i32, i32
  }
  func.func @transform_5(%arg0: i32) -> (i32, i32) {
    %c0_i32 = arith.constant 0 : i32
    %c0_i32_0 = arith.constant 0 : i32
    return %arg0, %c0_i32 : i32, i32
  }
}

</mosaic_0001>

<llo_original>
// kernel: tpu_custom_call.1
$region0: #{tpu_custom_call.1}
  #allocation0 [shape = 'u32[]', space=smem, size = 0x4, offset = 0x4, fixed_abs, tag = 'smem constant byte address 0x4 - core index']
  #allocation1 [shape = 'u32[144,128]{1,0:T(1,128)}', space=vmem, size = 0x12000, scoped, tag = 'internal scratch']
  %s0 = inlined_call_operand.vmem [shape: f32[256,32], index: 0, kind: input, shape index: {}]
  %s1 = inlined_call_operand.vmem [shape: f32[32,128], index: 1, kind: input, shape index: {}]
  %s2 = inlined_call_operand.vmem [shape: f32[128,128], index: 2, kind: input, shape index: {}]
  %s3 = inlined_call_operand.vmem [shape: f32[128,128], index: 3, kind: input, shape index: {}]
  %s4 = inlined_call_operand.vmem [shape: f32[3,128], index: 4, kind: input, shape index: {}]
  %s5 = inlined_call_operand.hbm [shape: f32[256,128], index: 5, kind: output, shape index: {}]
  %s6 = sld [smem:[#allocation0]]
  $region53: #{tpu_custom_call.1} parent=0
    _
  %s8 = ssub.s32 1, %s6
  %s9 = scalar_select 0, %s8, %s6
  $region1: #{tpu_custom_call.1} parent=0
    #allocation2 [shape = 'u8[131072]{0}', space=vmem, size = 0x20000, scoped, tag = 'output window, operand 0']
    #allocation3 [shape = 's32[2]{0}', space=sflag, size = 0x8, scoped, tag = 'scoped memory for tpu_custom_call.1']
    %10 = vsyncpa [#allocation3], 0
    %s11 = scalar_lea.sflag [#allocation3], 1
    %12 = vsyncpa %s11, 0
    loop: start=0, step=1, limit=4
    $region2: #{tpu_custom_call.1} parent=1 // loop_pre_header
      _
    $region3: #{tpu_custom_call.1} parent=1 // loop_header
      %s14 = sphi 0, %s18
      %p15 = scmp.ge.s32.totalorder %s14, 4
      %s24 = sphi 0, %s26
      %s27 = sphi 0, %s24
      %s28 = sphi 0, %s27
      %s44 = sphi 0, %s28
      %s48 = sphi 0, %s48
      %s50 = sphi 0, %s48
      %s51 = sphi 0, %s50
      %s65 = sphi 0, %s51
      %s69 = sphi 0, %s69
      %s71 = sphi 0, %s69
      %s72 = sphi 0, %s71
      %s86 = sphi 0, %s72
      %s90 = sphi 0, %s90
      %s92 = sphi 0, %s90
      %s93 = sphi 0, %s92
      %s107 = sphi 0, %s93
      %s111 = sphi 0, %s111
      %s113 = sphi 0, %s111
      %s114 = sphi 0, %s113
      %s128 = sphi 0, %s114
      %s134 = sphi 0, %s136
      %s137 = sphi 0, %s134
      %s138 = sphi 0, %s137
      %s154 = sphi 0, %s138
    $region4: #{tpu_custom_call.1} parent=1 // loop_header_branch
      %17 = sbr.rel (%p15) target = $region8
    $region5: #{tpu_custom_call.1} parent=1 // loop_body
      %s19 = ssub.s32 %s14, 1
      %s20 = ssub.s32 %s14, 2
      %s21 = sadd.s32 %s14, 1
      %s22 = ssub.s32 %s14, %s21
      %p23 = scmp.eq.s32.totalorder %s22, 0
      %s25 = sadd.s32 %s24, 1
      %s26 = scalar_select %p23, %s24, %s25
      %p29 = pneg %p23
      %p30 = scmp.eq.s32.totalorder %s14, 1
      %p31 = por %p29, %p30
      %p32 = scmp.ne.s32.totalorder %s24, %s27
      %p33 = scmp.eq.s32.totalorder %s14, 0
      %p34 = por %p32, %p33
      %p35 = scmp.ne.s32.totalorder %s24, %s27
      %p36 = scmp.eq.s32.totalorder %s19, 1
      %p37 = por %p35, %p36
      %p38 = scmp.ne.s32.totalorder %s27, %s28
      %p39 = scmp.eq.s32.totalorder %s19, 0
      %p40 = por %p38, %p39
      %p41 = scmp.ne.s32.totalorder %s27, %s28
      %p42 = scmp.eq.s32.totalorder %s20, 1
      %p43 = por %p41, %p42
      %p45 = scmp.ne.s32.totalorder %s28, %s44
      %p46 = scmp.eq.s32.totalorder %s20, 0
      %p47 = por %p45, %p46
      %s49 = sadd.s32 %s48, 1
      %p52 = scmp.eq.s32.totalorder %s14, 1
      %p53 = scmp.ne.s32.totalorder %s48, %s50
      %p54 = scmp.eq.s32.totalorder %s14, 0
      %p55 = por %p53, %p54
      %p56 = scmp.ne.s32.totalorder %s48, %s50
      %p57 = scmp.eq.s32.totalorder %s19, 1
      %p58 = por %p56, %p57
      %p59 = scmp.ne.s32.totalorder %s50, %s51
      %p60 = scmp.eq.s32.totalorder %s19, 0
      %p61 = por %p59, %p60
      %p62 = scmp.ne.s32.totalorder %s50, %s51
      %p63 = scmp.eq.s32.totalorder %s20, 1
      %p64 = por %p62, %p63
      %p66 = scmp.ne.s32.totalorder %s51, %s65
      %p67 = scmp.eq.s32.totalorder %s20, 0
      %p68 = por %p66, %p67
      %s70 = sadd.s32 %s69, 1
      %p73 = scmp.eq.s32.totalorder %s14, 1
      %p74 = scmp.ne.s32.totalorder %s69, %s71
      %p75 = scmp.eq.s32.totalorder %s14, 0
      %p76 = por %p74, %p75
      %p77 = scmp.ne.s32.totalorder %s69, %s71
      %p78 = scmp.eq.s32.totalorder %s19, 1
      %p79 = por %p77, %p78
      %p80 = scmp.ne.s32.totalorder %s71, %s72
      %p81 = scmp.eq.s32.totalorder %s19, 0
      %p82 = por %p80, %p81
      %p83 = scmp.ne.s32.totalorder %s71, %s72
      %p84 = scmp.eq.s32.totalorder %s20, 1
      %p85 = por %p83, %p84
      %p87 = scmp.ne.s32.totalorder %s72, %s86
      %p88 = scmp.eq.s32.totalorder %s20, 0
      %p89 = por %p87, %p88
      %s91 = sadd.s32 %s90, 1
      %p94 = scmp.eq.s32.totalorder %s14, 1
      %p95 = scmp.ne.s32.totalorder %s90, %s92
      %p96 = scmp.eq.s32.totalorder %s14, 0
      %p97 = por %p95, %p96
      %p98 = scmp.ne.s32.totalorder %s90, %s92
      %p99 = scmp.eq.s32.totalorder %s19, 1
      %p100 = por %p98, %p99
      %p101 = scmp.ne.s32.totalorder %s92, %s93
      %p102 = scmp.eq.s32.totalorder %s19, 0
      %p103 = por %p101, %p102
      %p104 = scmp.ne.s32.totalorder %s92, %s93
      %p105 = scmp.eq.s32.totalorder %s20, 1
      %p106 = por %p104, %p105
      %p108 = scmp.ne.s32.totalorder %s93, %s107
      %p109 = scmp.eq.s32.totalorder %s20, 0
      %p110 = por %p108, %p109
      %s112 = sadd.s32 %s111, 1
      %p115 = scmp.eq.s32.totalorder %s14, 1
      %p116 = scmp.ne.s32.totalorder %s111, %s113
      %p117 = scmp.eq.s32.totalorder %s14, 0
      %p118 = por %p116, %p117
      %p119 = scmp.ne.s32.totalorder %s111, %s113
      %p120 = scmp.eq.s32.totalorder %s19, 1
      %p121 = por %p119, %p120
      %p122 = scmp.ne.s32.totalorder %s113, %s114
      %p123 = scmp.eq.s32.totalorder %s19, 0
      %p124 = por %p122, %p123
      %p125 = scmp.ne.s32.totalorder %s113, %s114
      %p126 = scmp.eq.s32.totalorder %s20, 1
      %p127 = por %p125, %p126
      %p129 = scmp.ne.s32.totalorder %s114, %s128
      %p130 = scmp.eq.s32.totalorder %s20, 0
      %p131 = por %p129, %p130
      %s132 = ssub.s32 %s14, %s21
      %p133 = scmp.eq.s32.totalorder %s132, 0
      %s135 = sadd.s32 %s134, 1
      %s136 = scalar_select %p133, %s134, %s135
      %p139 = pneg %p133
      %p140 = scmp.eq.s32.totalorder %s14, 1
      %p141 = por %p139, %p140
      %p142 = scmp.ne.s32.totalorder %s134, %s137
      %p143 = scmp.eq.s32.totalorder %s14, 0
      %p144 = por %p142, %p143
      %p145 = scmp.ne.s32.totalorder %s134, %s137
      %p146 = scmp.eq.s32.totalorder %s19, 1
      %p147 = por %p145, %p146
      %p148 = scmp.ne.s32.totalorder %s137, %s138
      %p149 = scmp.eq.s32.totalorder %s19, 0
      %p150 = por %p148, %p149
      %p151 = scmp.ne.s32.totalorder %s137, %s138
      %p152 = scmp.eq.s32.totalorder %s20, 1
      %p153 = por %p151, %p152
      %p155 = scmp.ne.s32.totalorder %s138, %s154
      %p156 = scmp.eq.s32.totalorder %s20, 0
      %p157 = por %p155, %p156
      %p158 = scmp.le.s32.totalorder 1, %s14
      %p159 = scmp.lt.s32.totalorder %s14, 3
      %p160 = pnand %p158, %p159
      %p161 = pneg %p160
      // Predicated region
      $region9: #{tpu_custom_call.1} parent=5 // pred_check
        _
      $region10: #{tpu_custom_call.1} parent=5 // pred_check_branch
        %163 = sbr.rel (%p160) target = $region12
      $region11: #{tpu_custom_call.1} parent=5 // pred_region
        %s164 = ssub.s32 %s14, 1
        // Predicated region
        $region13: #{tpu_custom_call.1} parent=11 // pred_check
          %p165 = pneg %p61
        $region14: #{tpu_custom_call.1} parent=11 // pred_check_branch
          %167 = sbr.rel (%p165) target = $region16
        $region15: #{tpu_custom_call.1} parent=11 // pred_region
          _
        $region16: #{tpu_custom_call.1} parent=11 // pred_fallthru
          _
        // Predicated region
        $region17: #{tpu_custom_call.1} parent=11 // pred_check
          %p168 = pneg %p82
        $region18: #{tpu_custom_call.1} parent=11 // pred_check_branch
          %170 = sbr.rel (%p168) target = $region20
        $region19: #{tpu_custom_call.1} parent=11 // pred_region
          _
        $region20: #{tpu_custom_call.1} parent=11 // pred_fallthru
          _
        // Predicated region
        $region21: #{tpu_custom_call.1} parent=11 // pred_check
          %p171 = pneg %p103
        $region22: #{tpu_custom_call.1} parent=11 // pred_check_branch
          %173 = sbr.rel (%p171) target = $region24
        $region23: #{tpu_custom_call.1} parent=11 // pred_region
          _
        $region24: #{tpu_custom_call.1} parent=11 // pred_fallthru
          _
        // Predicated region
        $region25: #{tpu_custom_call.1} parent=11 // pred_check
          %p174 = pneg %p124
        $region26: #{tpu_custom_call.1} parent=11 // pred_check_branch
          %176 = sbr.rel (%p174) target = $region28
        $region27: #{tpu_custom_call.1} parent=11 // pred_region
          _
        $region28: #{tpu_custom_call.1} parent=11 // pred_fallthru
          _
      $region12: #{tpu_custom_call.1} parent=5 // pred_fallthru
        _
      %p177 = scmp.lt.s32.totalorder %s14, 2
      // Predicated region
      $region29: #{tpu_custom_call.1} parent=5 // pred_check
        %p178 = pneg %p177
      $region30: #{tpu_custom_call.1} parent=5 // pred_check_branch
        %180 = sbr.rel (%p178) target = $region32
      $region31: #{tpu_custom_call.1} parent=5 // pred_region
        // Predicated region
        $region33: #{tpu_custom_call.1} parent=31 // pred_check
          %p181 = pneg %p34
        $region34: #{tpu_custom_call.1} parent=31 // pred_check_branch
          %183 = sbr.rel (%p181) target = $region36
        $region35: #{tpu_custom_call.1} parent=31 // pred_region
          %s184 = smul.u32 16, %s14
          %p185 = scmp.lt.s32.totalorder %s184, 31
          %s186 = scalar_select %p185, %s184, 31
          %s187 = smul.addr %s186, 8
          %s188 = scalar_lea.vmem %s0, %s187
          %s189 = smul.u32 16, %s14
        $region36: #{tpu_custom_call.1} parent=31 // pred_fallthru
          _
      $region32: #{tpu_custom_call.1} parent=5 // pred_fallthru
        _
      %p190 = scmp.le.s32.totalorder 1, %s14
      %p191 = scmp.lt.s32.totalorder %s14, 3
      %p192 = pnand %p190, %p191
      %p193 = pneg %p192
      // Predicated region
      $region37: #{tpu_custom_call.1} parent=5 // pred_check
        _
      $region38: #{tpu_custom_call.1} parent=5 // pred_check_branch
        %195 = sbr.rel (%p192) target = $region40
      $region39: #{tpu_custom_call.1} parent=5 // pred_region
        %s196 = ssub.s32 %s14, 1
        %s197 = smul.u32 16, %s19
        %p198 = scmp.lt.s32.totalorder %s197, 31
        %s199 = scalar_select %p198, %s197, 31
        %s200 = smul.addr %s199, 8
        %s201 = scalar_lea.vmem %s0, %s200
        %p202 = pneg %p40
        %p203 = pneg %p37
        %p204 = pneg %p61
        %p205 = pneg %p58
        %p206 = pneg %p82
        %p207 = pneg %p79
        %p208 = pneg %p103
        %p209 = pneg %p100
        %p210 = pneg %p124
        %p211 = pneg %p121
        %p212 = pneg %p150
        %p213 = pneg %p147
        %s214 = sand.u32 %s137, 1
        %s215 = scalar_lea.sflag [#allocation3], %s214
        %s216 = sand.u32 %s137, 1
        %s217 = smul.addr %s216, 128
        %s218 = scalar_lea.vmem [#allocation2], %s217
        %s219 = smul.u32 16, %s19
        %p220 = scmp.lt.s32.totalorder %s219, 31
        %s221 = scalar_select %p220, %s219, 31
        %s222 = smul.addr %s221, 8
        %s223 = scalar_lea.vmem %s0, %s222
        %s224 = smul.u32 16, %s19
        %s225 = smul.u32 16, %s19
        %v226 = vld [vmem:[%s223] sm:$0xff]
        %v227 = vld [vmem:[%s223 + $0x8] sm:$0xff]
        %v228 = vld [vmem:[%s223 + $0x10] sm:$0xff]
        %v229 = vld [vmem:[%s223 + $0x18] sm:$0xff]
        %v230 = vld [vmem:[%s223 + $0x20] sm:$0xff]
        %v231 = vld [vmem:[%s223 + $0x28] sm:$0xff]
        %v232 = vld [vmem:[%s223 + $0x30] sm:$0xff]
        %v233 = vld [vmem:[%s223 + $0x38] sm:$0xff]
        %v234 = vld [vmem:[%s223 + $0x40] sm:$0xff]
        %v235 = vld [vmem:[%s223 + $0x48] sm:$0xff]
        %v236 = vld [vmem:[%s223 + $0x50] sm:$0xff]
        %v237 = vld [vmem:[%s223 + $0x58] sm:$0xff]
        %v238 = vld [vmem:[%s223 + $0x60] sm:$0xff]
        %v239 = vld [vmem:[%s223 + $0x68] sm:$0xff]
        %v240 = vld [vmem:[%s223 + $0x70] sm:$0xff]
        %v241 = vld [vmem:[%s223 + $0x78] sm:$0xff]
        %v242 = vld [vmem:[%s4] sm:$0x7]
        %v243 = vld [vmem:[%s1] sm:$0xff]
        %v244 = vld [vmem:[%s1 + $0x8] sm:$0xff]
        %v245 = vld [vmem:[%s1 + $0x10] sm:$0xff]
        %v246 = vld [vmem:[%s1 + $0x18] sm:$0xff]
        %v247 = vlaneseq
        %v248 = vshrl.u32 %v247, 7
        %v249 = vsub.s32 0, %v248
        %v250 = vrot.slane %v242, %v249
        %vm251 = vcmask 261120
        %v253 = vsel %vm251, %v226, 0
        %v256 = vsel %vm251, %v227, 0
        %v259 = vsel %vm251, %v228, 0
        %v262 = vsel %vm251, %v229, 0
        %v265 = vsel %vm251, %v230, 0
        %v268 = vsel %vm251, %v231, 0
        %v271 = vsel %vm251, %v232, 0
        %v274 = vsel %vm251, %v233, 0
        %v277 = vsel %vm251, %v234, 0
        %v280 = vsel %vm251, %v235, 0
        %v283 = vsel %vm251, %v236, 0
        %v286 = vsel %vm251, %v237, 0
        %v289 = vsel %vm251, %v238, 0
        %v292 = vsel %vm251, %v239, 0
        %v295 = vsel %vm251, %v240, 0
        %v298 = vsel %vm251, %v241, 0
        %300 = vmatprep.subr.mxu0 0.0
        %301 = vmatpush1.msra.mxu0 %v243
        %302 = vmatprep.subr.mxu0 0.0
        %303 = vmatpush1.msra.mxu0 %v244
        %304 = vmatprep.subr.mxu0 0.0
        %305 = vmatpush1.msra.mxu0 %v245
        %306 = vmatprep.subr.mxu0 0.0
        %307 = vmatpush1.msra.mxu0 %v246
        %308 = vmatprep.subr.mxu0 0.0
        %309 = vmatpush1.msra.mxu0 0.0
        %310 = vmatprep.subr.mxu0 0.0
        %311 = vmatpush1.msra.mxu0 0.0
        %312 = vmatprep.subr.mxu0 0.0
        %313 = vmatpush1.msra.mxu0 0.0
        %314 = vmatprep.subr.mxu0 0.0
        %315 = vmatpush1.msra.mxu0 0.0
        %316 = vmatprep.subr.mxu0 0.0
        %317 = vmatpush1.msra.mxu0 0.0
        %318 = vmatprep.subr.mxu0 0.0
        %319 = vmatpush1.msra.mxu0 0.0
        %320 = vmatprep.subr.mxu0 0.0
        %321 = vmatpush1.msra.mxu0 0.0
        %322 = vmatprep.subr.mxu0 0.0
        %323 = vmatpush1.msra.mxu0 0.0
        %324 = vmatprep.subr.mxu0 0.0
        %325 = vmatpush1.msra.mxu0 0.0
        %326 = vmatprep.subr.mxu0 0.0
        %327 = vmatpush1.msra.mxu0 0.0
        %328 = vmatprep.subr.mxu0 0.0
        %329 = vmatpush1.msra.mxu0 0.0
        %330 = vmatprep.subr.mxu0 0.0
        %331 = vmatpush1.msra.mxu0 0.0
        %332 = vmatprep.subr.mxu0 0.0
        %333 = vmatpush1.msra.mxu0 0.0
        %334 = vmatprep.subr.mxu0 0.0
        %335 = vmatpush1.msra.mxu0 0.0
        %336 = vmatprep.subr.mxu0 0.0
        %337 = vmatpush1.msra.mxu0 0.0
        %338 = vmatprep.subr.mxu0 0.0
        %339 = vmatpush1.msra.mxu0 0.0
        %340 = vmatprep.subr.mxu0 0.0
        %341 = vmatpush1.msra.mxu0 0.0
        %342 = vmatprep.subr.mxu0 0.0
        %343 = vmatpush1.msra.mxu0 0.0
        %344 = vmatprep.subr.mxu0 0.0
        %345 = vmatpush1.msra.mxu0 0.0
        %346 = vmatprep.subr.mxu0 0.0
        %347 = vmatpush1.msra.mxu0 0.0
        %348 = vmatprep.subr.mxu0 0.0
        %349 = vmatpush1.msra.mxu0 0.0
        %350 = vmatprep.subr.mxu0 0.0
        %351 = vmatpush1.msra.mxu0 0.0
        %352 = vmatprep.subr.mxu0 0.0
        %353 = vmatpush1.msra.mxu0 0.0
        %354 = vmatprep.subr.mxu0 0.0
        %355 = vmatpush1.msra.mxu0 0.0
        %356 = vmatprep.subr.mxu0 0.0
        %357 = vmatpush1.msra.mxu0 0.0
        %358 = vmatprep.subr.mxu0 0.0
        %359 = vmatpush1.msra.mxu0 0.0
        %360 = vmatprep.subr.mxu0 0.0
        %361 = vmatpush1.msra.mxu0 0.0
        %362 = vmatprep.subr.mxu0 0.0
        %363 = vmatpush1.msra.mxu0 0.0
        %364 = vmatprep.mubr.f32.mxu0 0.0
        %365 = vmatmul.mubr.f32.gmra.mrb[0].mxu0 %v253
        %v366 = vpop.f32.mrb[0].mxu0
        %v367 = vadd.f32 %v250, %v366
        %v368 = vpop.f32.mrb[0].mxu0
        %369 = vmatprep.mubr.f32.mxu0 0.0
        %370 = vmatmul.mubr.f32.gmra.mrb[0].mxu0 %v256
        %v371 = vpop.f32.mrb[0].mxu0
        %v372 = vadd.f32 %v250, %v371
        %v373 = vpop.f32.mrb[0].mxu0
        %374 = vmatprep.mubr.f32.mxu0 0.0
        %375 = vmatmul.mubr.f32.gmra.mrb[0].mxu0 %v259
        %v376 = vpop.f32.mrb[0].mxu0
        %v377 = vadd.f32 %v250, %v376
        %v378 = vpop.f32.mrb[0].mxu0
        %379 = vmatprep.mubr.f32.mxu0 0.0
        %380 = vmatmul.mubr.f32.gmra.mrb[0].mxu0 %v262
        %v381 = vpop.f32.mrb[0].mxu0
        %v382 = vadd.f32 %v250, %v381
        %v383 = vpop.f32.mrb[0].mxu0
        %384 = vmatprep.mubr.f32.mxu0 0.0
        %385 = vmatmul.mubr.f32.gmra.mrb[0].mxu0 %v265
        %v386 = vpop.f32.mrb[0].mxu0
        %v387 = vadd.f32 %v250, %v386
        %v388 = vpop.f32.mrb[0].mxu0
        %389 = vmatprep.mubr.f32.mxu0 0.0
        %390 = vmatmul.mubr.f32.gmra.mrb[0].mxu0 %v268
        %v391 = vpop.f32.mrb[0].mxu0
        %v392 = vadd.f32 %v250, %v391
        %v393 = vpop.f32.mrb[0].mxu0
        %394 = vmatprep.mubr.f32.mxu0 0.0
        %395 = vmatmul.mubr.f32.gmra.mrb[0].mxu0 %v271
        %v396 = vpop.f32.mrb[0].mxu0
        %v397 = vadd.f32 %v250, %v396
        %v398 = vpop.f32.mrb[0].mxu0
        %399 = vmatprep.mubr.f32.mxu0 0.0
        %400 = vmatmul.mubr.f32.gmra.mrb[0].mxu0 %v274
        %v401 = vpop.f32.mrb[0].mxu0
        %v402 = vadd.f32 %v250, %v401
        %v403 = vpop.f32.mrb[0].mxu0
        %404 = vmatprep.mubr.f32.mxu0 0.0
        %405 = vmatmul.mubr.f32.gmra.mrb[0].mxu0 %v277
        %v406 = vpop.f32.mrb[0].mxu0
        %v407 = vadd.f32 %v250, %v406
        %v408 = vpop.f32.mrb[0].mxu0
        %409 = vmatprep.mubr.f32.mxu0 0.0
        %410 = vmatmul.mubr.f32.gmra.mrb[0].mxu0 %v280
        %v411 = vpop.f32.mrb[0].mxu0
        %v412 = vadd.f32 %v250, %v411
        %v413 = vpop.f32.mrb[0].mxu0
        %414 = vmatprep.mubr.f32.mxu0 0.0
        %415 = vmatmul.mubr.f32.gmra.mrb[0].mxu0 %v283
        %v416 = vpop.f32.mrb[0].mxu0
        %v417 = vadd.f32 %v250, %v416
        %v418 = vpop.f32.mrb[0].mxu0
        %419 = vmatprep.mubr.f32.mxu0 0.0
        %420 = vmatmul.mubr.f32.gmra.mrb[0].mxu0 %v286
        %v421 = vpop.f32.mrb[0].mxu0
        %v422 = vadd.f32 %v250, %v421
        %v423 = vpop.f32.mrb[0].mxu0
        %424 = vmatprep.mubr.f32.mxu0 0.0
        %425 = vmatmul.mubr.f32.gmra.mrb[0].mxu0 %v289
        %v426 = vpop.f32.mrb[0].mxu0
        %v427 = vadd.f32 %v250, %v426
        %v428 = vpop.f32.mrb[0].mxu0
        %429 = vmatprep.mubr.f32.mxu0 0.0
        %430 = vmatmul.mubr.f32.gmra.mrb[0].mxu0 %v292
        %v431 = vpop.f32.mrb[0].mxu0
        %v432 = vadd.f32 %v250, %v431
        %v433 = vpop.f32.mrb[0].mxu0
        %434 = vmatprep.mubr.f32.mxu0 0.0
        %435 = vmatmul.mubr.f32.gmra.mrb[0].mxu0 %v295
        %v436 = vpop.f32.mrb[0].mxu0
        %v437 = vadd.f32 %v250, %v436
        %v438 = vpop.f32.mrb[0].mxu0
        %439 = vmatprep.mubr.f32.mxu0 0.0
        %440 = vmatmul.mubr.f32.gmra.mrb[0].mxu0 %v298
        %v441 = vpop.f32.mrb[0].mxu0
        %v442 = vadd.f32 %v250, %v441
        %v443 = vpop.f32.mrb[0].mxu0
        %444 = vdwg.mxu0
        %v445 = vmax.f32 %v367, 0.0
        %v446 = vmax.f32 %v372, 0.0
        %v447 = vmax.f32 %v377, 0.0
        %v448 = vmax.f32 %v382, 0.0
        %v449 = vmax.f32 %v387, 0.0
        %v450 = vmax.f32 %v392, 0.0
        %v451 = vmax.f32 %v397, 0.0
        %v452 = vmax.f32 %v402, 0.0
        %v453 = vmax.f32 %v407, 0.0
        %v454 = vmax.f32 %v412, 0.0
        %v455 = vmax.f32 %v417, 0.0
        %v456 = vmax.f32 %v422, 0.0
        %v457 = vmax.f32 %v427, 0.0
        %v458 = vmax.f32 %v432, 0.0
        %v459 = vmax.f32 %v437, 0.0
        %v460 = vmax.f32 %v442, 0.0
        %v461 = vld [vmem:[%s2] sm:$0xff]
        %v462 = vld [vmem:[%s2 + $0x8] sm:$0xff]
        %v463 = vld [vmem:[%s2 + $0x10] sm:$0xff]
        %v464 = vld [vmem:[%s2 + $0x18] sm:$0xff]
        %v465 = vld [vmem:[%s2 + $0x20] sm:$0xff]
        %v466 = vld [vmem:[%s2 + $0x28] sm:$0xff]
        %v467 = vld [vmem:[%s2 + $0x30] sm:$0xff]
        %v468 = vld [vmem:[%s2 + $0x38] sm:$0xff]
        %v469 = vld [vmem:[%s2 + $0x40] sm:$0xff]
        %v470 = vld [vmem:[%s2 + $0x48] sm:$0xff]
        %v471 = vld [vmem:[%s2 + $0x50] sm:$0xff]
        %v472 = vld [vmem:[%s2 + $0x58] sm:$0xff]
        %v473 = vld [vmem:[%s2 + $0x60] sm:$0xff]
        %v474 = vld [vmem:[%s2 + $0x68] sm:$0xff]
        %v475 = vld [vmem:[%s2 + $0x70] sm:$0xff]
        %v476 = vld [vmem:[%s2 + $0x78] sm:$0xff]
        %v477 = vlaneseq
        %v478 = vshrl.u32 %v477, 7
        %v479 = vsub.s32 1, %v478
        %v480 = vrot.slane %v242, %v479
        %481 = vmatprep.subr.mxu0 0.0
        %482 = vmatpush1.msra.mxu0 %v461
        %483 = vmatprep.subr.mxu0 0.0
        %484 = vmatpush1.msra.mxu0 %v462
        %485 = vmatprep.subr.mxu0 0.0
        %486 = vmatpush1.msra.mxu0 %v463
        %487 = vmatprep.subr.mxu0 0.0
        %488 = vmatpush1.msra.mxu0 %v464
        %489 = vmatprep.subr.mxu0 0.0
        %490 = vmatpush1.msra.mxu0 %v465
        %491 = vmatprep.subr.mxu0 0.0
        %492 = vmatpush1.msra.mxu0 %v466
        %493 = vmatprep.subr.mxu0 0.0
        %494 = vmatpush1.msra.mxu0 %v467
        %495 = vmatprep.subr.mxu0 0.0
        %496 = vmatpush1.msra.mxu0 %v468
        %497 = vmatprep.subr.mxu0 0.0
        %498 = vmatpush1.msra.mxu0 %v469
        %499 = vmatprep.subr.mxu0 0.0
        %500 = vmatpush1.msra.mxu0 %v470
        %501 = vmatprep.subr.mxu0 0.0
        %502 = vmatpush1.msra.mxu0 %v471
        %503 = vmatprep.subr.mxu0 0.0
        %504 = vmatpush1.msra.mxu0 %v472
        %505 = vmatprep.subr.mxu0 0.0
        %506 = vmatpush1.msra.mxu0 %v473
        %507 = vmatprep.subr.mxu0 0.0
        %508 = vmatpush1.msra.mxu0 %v474
        %509 = vmatprep.subr.mxu0 0.0
        %510 = vmatpush1.msra.mxu0 %v475
        %511 = vmatprep.subr.mxu0 0.0
        %512 = vmatpush1.msra.mxu0 %v476
        %513 = vmatprep.subr.mxu0 0.0
        %514 = vmatpush1.msra.mxu0 0.0
        %515 = vmatprep.subr.mxu0 0.0
        %516 = vmatpush1.msra.mxu0 0.0
        %517 = vmatprep.subr.mxu0 0.0
        %518 = vmatpush1.msra.mxu0 0.0
        %519 = vmatprep.subr.mxu0 0.0
        %520 = vmatpush1.msra.mxu0 0.0
        %521 = vmatprep.subr.mxu0 0.0
        %522 = vmatpush1.msra.mxu0 0.0
        %523 = vmatprep.subr.mxu0 0.0
        %524 = vmatpush1.msra.mxu0 0.0
        %525 = vmatprep.subr.mxu0 0.0
        %526 = vmatpush1.msra.mxu0 0.0
        %527 = vmatprep.subr.mxu0 0.0
        %528 = vmatpush1.msra.mxu0 0.0
        %529 = vmatprep.subr.mxu0 0.0
        %530 = vmatpush1.msra.mxu0 0.0
        %531 = vmatprep.subr.mxu0 0.0
        %532 = vmatpush1.msra.mxu0 0.0
        %533 = vmatprep.subr.mxu0 0.0
        %534 = vmatpush1.msra.mxu0 0.0
        %535 = vmatprep.subr.mxu0 0.0
        %536 = vmatpush1.msra.mxu0 0.0
        %537 = vmatprep.subr.mxu0 0.0
        %538 = vmatpush1.msra.mxu0 0.0
        %539 = vmatprep.subr.mxu0 0.0
        %540 = vmatpush1.msra.mxu0 0.0
        %541 = vmatprep.subr.mxu0 0.0
        %542 = vmatpush1.msra.mxu0 0.0
        %543 = vmatprep.subr.mxu0 0.0
        %544 = vmatpush1.msra.mxu0 0.0
        %545 = vmatprep.mubr.f32.mxu0 0.0
        %546 = vmatmul.mubr.f32.gmra.mrb[0].mxu0 %v445
        %v547 = vpop.f32.mrb[0].mxu0
        %v548 = vadd.f32 %v480, %v547
        %v549 = vpop.f32.mrb[0].mxu0
        %550 = vmatprep.mubr.f32.mxu0 0.0
        %551 = vmatmul.mubr.f32.gmra.mrb[0].mxu0 %v446
        %v552 = vpop.f32.mrb[0].mxu0
        %v553 = vadd.f32 %v480, %v552
        %v554 = vpop.f32.mrb[0].mxu0
        %555 = vmatprep.mubr.f32.mxu0 0.0
        %556 = vmatmul.mubr.f32.gmra.mrb[0].mxu0 %v447
        %v557 = vpop.f32.mrb[0].mxu0
        %v558 = vadd.f32 %v480, %v557
        %v559 = vpop.f32.mrb[0].mxu0
        %560 = vmatprep.mubr.f32.mxu0 0.0
        %561 = vmatmul.mubr.f32.gmra.mrb[0].mxu0 %v448
        %v562 = vpop.f32.mrb[0].mxu0
        %v563 = vadd.f32 %v480, %v562
        %v564 = vpop.f32.mrb[0].mxu0
        %565 = vmatprep.mubr.f32.mxu0 0.0
        %566 = vmatmul.mubr.f32.gmra.mrb[0].mxu0 %v449
        %v567 = vpop.f32.mrb[0].mxu0
        %v568 = vadd.f32 %v480, %v567
        %v569 = vpop.f32.mrb[0].mxu0
        %570 = vmatprep.mubr.f32.mxu0 0.0
        %571 = vmatmul.mubr.f32.gmra.mrb[0].mxu0 %v450
        %v572 = vpop.f32.mrb[0].mxu0
        %v573 = vadd.f32 %v480, %v572
        %v574 = vpop.f32.mrb[0].mxu0
        %575 = vmatprep.mubr.f32.mxu0 0.0
        %576 = vmatmul.mubr.f32.gmra.mrb[0].mxu0 %v451
        %v577 = vpop.f32.mrb[0].mxu0
        %v578 = vadd.f32 %v480, %v577
        %v579 = vpop.f32.mrb[0].mxu0
        %580 = vmatprep.mubr.f32.mxu0 0.0
        %581 = vmatmul.mubr.f32.gmra.mrb[0].mxu0 %v452
        %v582 = vpop.f32.mrb[0].mxu0
        %v583 = vadd.f32 %v480, %v582
        %v584 = vpop.f32.mrb[0].mxu0
        %585 = vmatprep.mubr.f32.mxu0 0.0
        %586 = vmatmul.mubr.f32.gmra.mrb[0].mxu0 %v453
        %v587 = vpop.f32.mrb[0].mxu0
        %v588 = vadd.f32 %v480, %v587
        %v589 = vpop.f32.mrb[0].mxu0
        %590 = vmatprep.mubr.f32.mxu0 0.0
        %591 = vmatmul.mubr.f32.gmra.mrb[0].mxu0 %v454
        %v592 = vpop.f32.mrb[0].mxu0
        %v593 = vadd.f32 %v480, %v592
        %v594 = vpop.f32.mrb[0].mxu0
        %595 = vmatprep.mubr.f32.mxu0 0.0
        %596 = vmatmul.mubr.f32.gmra.mrb[0].mxu0 %v455
        %v597 = vpop.f32.mrb[0].mxu0
        %v598 = vadd.f32 %v480, %v597
        %v599 = vpop.f32.mrb[0].mxu0
        %600 = vmatprep.mubr.f32.mxu0 0.0
        %601 = vmatmul.mubr.f32.gmra.mrb[0].mxu0 %v456
        %v602 = vpop.f32.mrb[0].mxu0
        %v603 = vadd.f32 %v480, %v602
        %v604 = vpop.f32.mrb[0].mxu0
        %605 = vmatprep.mubr.f32.mxu0 0.0
        %606 = vmatmul.mubr.f32.gmra.mrb[0].mxu0 %v457
        %v607 = vpop.f32.mrb[0].mxu0
        %v608 = vadd.f32 %v480, %v607
        %v609 = vpop.f32.mrb[0].mxu0
        %610 = vmatprep.mubr.f32.mxu0 0.0
        %611 = vmatmul.mubr.f32.gmra.mrb[0].mxu0 %v458
        %v612 = vpop.f32.mrb[0].mxu0
        %v613 = vadd.f32 %v480, %v612
        %v614 = vpop.f32.mrb[0].mxu0
        %615 = vmatprep.mubr.f32.mxu0 0.0
        %616 = vmatmul.mubr.f32.gmra.mrb[0].mxu0 %v459
        %v617 = vpop.f32.mrb[0].mxu0
        %v618 = vadd.f32 %v480, %v617
        %v619 = vpop.f32.mrb[0].mxu0
        %620 = vmatprep.mubr.f32.mxu0 0.0
        %621 = vmatmul.mubr.f32.gmra.mrb[0].mxu0 %v460
        %v622 = vpop.f32.mrb[0].mxu0
        %v623 = vadd.f32 %v480, %v622
        %v624 = vpop.f32.mrb[0].mxu0
        %625 = vdwg.mxu0
        %v626 = vmax.f32 %v548, 0.0
        %v627 = vmax.f32 %v553, 0.0
        %v628 = vmax.f32 %v558, 0.0
        %v629 = vmax.f32 %v563, 0.0
        %v630 = vmax.f32 %v568, 0.0
        %v631 = vmax.f32 %v573, 0.0
        %v632 = vmax.f32 %v578, 0.0
        %v633 = vmax.f32 %v583, 0.0
        %v634 = vmax.f32 %v588, 0.0
        %v635 = vmax.f32 %v593, 0.0
        %v636 = vmax.f32 %v598, 0.0
        %v637 = vmax.f32 %v603, 0.0
        %v638 = vmax.f32 %v608, 0.0
        %v639 = vmax.f32 %v613, 0.0
        %v640 = vmax.f32 %v618, 0.0
        %v641 = vmax.f32 %v623, 0.0
        %v642 = vld [vmem:[%s3] sm:$0xff]
        %v643 = vld [vmem:[%s3 + $0x8] sm:$0xff]
        %v644 = vld [vmem:[%s3 + $0x10] sm:$0xff]
        %v645 = vld [vmem:[%s3 + $0x18] sm:$0xff]
        %v646 = vld [vmem:[%s3 + $0x20] sm:$0xff]
        %v647 = vld [vmem:[%s3 + $0x28] sm:$0xff]
        %v648 = vld [vmem:[%s3 + $0x30] sm:$0xff]
        %v649 = vld [vmem:[%s3 + $0x38] sm:$0xff]
        %v650 = vld [vmem:[%s3 + $0x40] sm:$0xff]
        %v651 = vld [vmem:[%s3 + $0x48] sm:$0xff]
        %v652 = vld [vmem:[%s3 + $0x50] sm:$0xff]
        %v653 = vld [vmem:[%s3 + $0x58] sm:$0xff]
        %v654 = vld [vmem:[%s3 + $0x60] sm:$0xff]
        %v655 = vld [vmem:[%s3 + $0x68] sm:$0xff]
        %v656 = vld [vmem:[%s3 + $0x70] sm:$0xff]
        %v657 = vld [vmem:[%s3 + $0x78] sm:$0xff]
        %v658 = vlaneseq
        %v659 = vshrl.u32 %v658, 7
        %v660 = vsub.s32 2, %v659
        %v661 = vrot.slane %v242, %v660
        %662 = vmatprep.subr.mxu0 0.0
        %663 = vmatpush1.msra.mxu0 %v642
        %664 = vmatprep.subr.mxu0 0.0
        %665 = vmatpush1.msra.mxu0 %v643
        %666 = vmatprep.subr.mxu0 0.0
        %667 = vmatpush1.msra.mxu0 %v644
        %668 = vmatprep.subr.mxu0 0.0
        %669 = vmatpush1.msra.mxu0 %v645
        %670 = vmatprep.subr.mxu0 0.0
        %671 = vmatpush1.msra.mxu0 %v646
        %672 = vmatprep.subr.mxu0 0.0
        %673 = vmatpush1.msra.mxu0 %v647
        %674 = vmatprep.subr.mxu0 0.0
        %675 = vmatpush1.msra.mxu0 %v648
        %676 = vmatprep.subr.mxu0 0.0
        %677 = vmatpush1.msra.mxu0 %v649
        %678 = vmatprep.subr.mxu0 0.0
        %679 = vmatpush1.msra.mxu0 %v650
        %680 = vmatprep.subr.mxu0 0.0
        %681 = vmatpush1.msra.mxu0 %v651
        %682 = vmatprep.subr.mxu0 0.0
        %683 = vmatpush1.msra.mxu0 %v652
        %684 = vmatprep.subr.mxu0 0.0
        %685 = vmatpush1.msra.mxu0 %v653
        %686 = vmatprep.subr.mxu0 0.0
        %687 = vmatpush1.msra.mxu0 %v654
        %688 = vmatprep.subr.mxu0 0.0
        %689 = vmatpush1.msra.mxu0 %v655
        %690 = vmatprep.subr.mxu0 0.0
        %691 = vmatpush1.msra.mxu0 %v656
        %692 = vmatprep.subr.mxu0 0.0
        %693 = vmatpush1.msra.mxu0 %v657
        %694 = vmatprep.subr.mxu0 0.0
        %695 = vmatpush1.msra.mxu0 0.0
        %696 = vmatprep.subr.mxu0 0.0
        %697 = vmatpush1.msra.mxu0 0.0
        %698 = vmatprep.subr.mxu0 0.0
        %699 = vmatpush1.msra.mxu0 0.0
        %700 = vmatprep.subr.mxu0 0.0
        %701 = vmatpush1.msra.mxu0 0.0
        %702 = vmatprep.subr.mxu0 0.0
        %703 = vmatpush1.msra.mxu0 0.0
        %704 = vmatprep.subr.mxu0 0.0
        %705 = vmatpush1.msra.mxu0 0.0
        %706 = vmatprep.subr.mxu0 0.0
        %707 = vmatpush1.msra.mxu0 0.0
        %708 = vmatprep.subr.mxu0 0.0
        %709 = vmatpush1.msra.mxu0 0.0
        %710 = vmatprep.subr.mxu0 0.0
        %711 = vmatpush1.msra.mxu0 0.0
        %712 = vmatprep.subr.mxu0 0.0
        %713 = vmatpush1.msra.mxu0 0.0
        %714 = vmatprep.subr.mxu0 0.0
        %715 = vmatpush1.msra.mxu0 0.0
        %716 = vmatprep.subr.mxu0 0.0
        %717 = vmatpush1.msra.mxu0 0.0
        %718 = vmatprep.subr.mxu0 0.0
        %719 = vmatpush1.msra.mxu0 0.0
        %720 = vmatprep.subr.mxu0 0.0
        %721 = vmatpush1.msra.mxu0 0.0
        %722 = vmatprep.subr.mxu0 0.0
        %723 = vmatpush1.msra.mxu0 0.0
        %724 = vmatprep.subr.mxu0 0.0
        %725 = vmatpush1.msra.mxu0 0.0
        %726 = vmatprep.mubr.f32.mxu0 0.0
        %727 = vmatmul.mubr.f32.gmra.mrb[0].mxu0 %v626
        %v728 = vpop.f32.mrb[0].mxu0
        %v729 = vadd.f32 %v661, %v728
        %v730 = vpop.f32.mrb[0].mxu0
        %731 = vmatprep.mubr.f32.mxu0 0.0
        %732 = vmatmul.mubr.f32.gmra.mrb[0].mxu0 %v627
        %v733 = vpop.f32.mrb[0].mxu0
        %v734 = vadd.f32 %v661, %v733
        %v735 = vpop.f32.mrb[0].mxu0
        %736 = vmatprep.mubr.f32.mxu0 0.0
        %737 = vmatmul.mubr.f32.gmra.mrb[0].mxu0 %v628
        %v738 = vpop.f32.mrb[0].mxu0
        %v739 = vadd.f32 %v661, %v738
        %v740 = vpop.f32.mrb[0].mxu0
        %741 = vmatprep.mubr.f32.mxu0 0.0
        %742 = vmatmul.mubr.f32.gmra.mrb[0].mxu0 %v629
        %v743 = vpop.f32.mrb[0].mxu0
        %v744 = vadd.f32 %v661, %v743
        %v745 = vpop.f32.mrb[0].mxu0
        %746 = vmatprep.mubr.f32.mxu0 0.0
        %747 = vmatmul.mubr.f32.gmra.mrb[0].mxu0 %v630
        %v748 = vpop.f32.mrb[0].mxu0
        %v749 = vadd.f32 %v661, %v748
        %v750 = vpop.f32.mrb[0].mxu0
        %751 = vmatprep.mubr.f32.mxu0 0.0
        %752 = vmatmul.mubr.f32.gmra.mrb[0].mxu0 %v631
        %v753 = vpop.f32.mrb[0].mxu0
        %v754 = vadd.f32 %v661, %v753
        %v755 = vpop.f32.mrb[0].mxu0
        %756 = vmatprep.mubr.f32.mxu0 0.0
        %757 = vmatmul.mubr.f32.gmra.mrb[0].mxu0 %v632
        %v758 = vpop.f32.mrb[0].mxu0
        %v759 = vadd.f32 %v661, %v758
        %v760 = vpop.f32.mrb[0].mxu0
        %761 = vmatprep.mubr.f32.mxu0 0.0
        %762 = vmatmul.mubr.f32.gmra.mrb[0].mxu0 %v633
        %v763 = vpop.f32.mrb[0].mxu0
        %v764 = vadd.f32 %v661, %v763
        %v765 = vpop.f32.mrb[0].mxu0
        %766 = vmatprep.mubr.f32.mxu0 0.0
        %767 = vmatmul.mubr.f32.gmra.mrb[0].mxu0 %v634
        %v768 = vpop.f32.mrb[0].mxu0
        %v769 = vadd.f32 %v661, %v768
        %v770 = vpop.f32.mrb[0].mxu0
        %771 = vmatprep.mubr.f32.mxu0 0.0
        %772 = vmatmul.mubr.f32.gmra.mrb[0].mxu0 %v635
        %v773 = vpop.f32.mrb[0].mxu0
        %v774 = vadd.f32 %v661, %v773
        %v775 = vpop.f32.mrb[0].mxu0
        %776 = vmatprep.mubr.f32.mxu0 0.0
        %777 = vmatmul.mubr.f32.gmra.mrb[0].mxu0 %v636
        %v778 = vpop.f32.mrb[0].mxu0
        %v779 = vadd.f32 %v661, %v778
        %v780 = vpop.f32.mrb[0].mxu0
        %781 = vmatprep.mubr.f32.mxu0 0.0
        %782 = vmatmul.mubr.f32.gmra.mrb[0].mxu0 %v637
        %v783 = vpop.f32.mrb[0].mxu0
        %v784 = vadd.f32 %v661, %v783
        %v785 = vpop.f32.mrb[0].mxu0
        %786 = vmatprep.mubr.f32.mxu0 0.0
        %787 = vmatmul.mubr.f32.gmra.mrb[0].mxu0 %v638
        %v788 = vpop.f32.mrb[0].mxu0
        %v789 = vadd.f32 %v661, %v788
        %v790 = vpop.f32.mrb[0].mxu0
        %791 = vmatprep.mubr.f32.mxu0 0.0
        %792 = vmatmul.mubr.f32.gmra.mrb[0].mxu0 %v639
        %v793 = vpop.f32.mrb[0].mxu0
        %v794 = vadd.f32 %v661, %v793
        %v795 = vpop.f32.mrb[0].mxu0
        %796 = vmatprep.mubr.f32.mxu0 0.0
        %797 = vmatmul.mubr.f32.gmra.mrb[0].mxu0 %v640
        %v798 = vpop.f32.mrb[0].mxu0
        %v799 = vadd.f32 %v661, %v798
        %v800 = vpop.f32.mrb[0].mxu0
        %801 = vmatprep.mubr.f32.mxu0 0.0
        %802 = vmatmul.mubr.f32.gmra.mrb[0].mxu0 %v641
        %v803 = vpop.f32.mrb[0].mxu0
        %v804 = vadd.f32 %v661, %v803
        %v805 = vpop.f32.mrb[0].mxu0
        %806 = vdwg.mxu0
        %807 = vst [vmem:[%s218] sm:$0xff] %v729
        %808 = vst [vmem:[%s218 + $0x8] sm:$0xff] %v734
        %809 = vst [vmem:[%s218 + $0x10] sm:$0xff] %v739
        %810 = vst [vmem:[%s218 + $0x18] sm:$0xff] %v744
        %811 = vst [vmem:[%s218 + $0x20] sm:$0xff] %v749
        %812 = vst [vmem:[%s218 + $0x28] sm:$0xff] %v754
        %813 = vst [vmem:[%s218 + $0x30] sm:$0xff] %v759
        %814 = vst [vmem:[%s218 + $0x38] sm:$0xff] %v764
        %815 = vst [vmem:[%s218 + $0x40] sm:$0xff] %v769
        %816 = vst [vmem:[%s218 + $0x48] sm:$0xff] %v774
        %817 = vst [vmem:[%s218 + $0x50] sm:$0xff] %v779
        %818 = vst [vmem:[%s218 + $0x58] sm:$0xff] %v784
        %819 = vst [vmem:[%s218 + $0x60] sm:$0xff] %v789
        %820 = vst [vmem:[%s218 + $0x68] sm:$0xff] %v794
        %821 = vst [vmem:[%s218 + $0x70] sm:$0xff] %v799
        %822 = vst [vmem:[%s218 + $0x78] sm:$0xff] %v804
        %s823 = sand.u32 %s137, 1
        %s824 = scalar_lea.sflag [#allocation3], %s823
        %s825 = sand.u32 %s137, 1
        %s826 = smul.addr %s825, 128
        %s827 = scalar_lea.vmem [#allocation2], %s826
        // Predicated region
        $region41: #{tpu_custom_call.1} parent=39 // pred_check
          %p828 = pneg %p147
        $region42: #{tpu_custom_call.1} parent=39 // pred_check_branch
          %830 = sbr.rel (%p828) target = $region44
        $region43: #{tpu_custom_call.1} parent=39 // pred_region
          %s831 = smul.u32 16, %s19
          %s833 = ssub.s32 2048, 2048
          %834 = vsyncadd %s824, %s833
          %s835 = smul.addr %s831, 128
          %s836 = scalar_lea.hbm %s5, %s835
          %s837 = sshll.u32 %s827, 4
          %s838 = int_to_ptr.vmem [resolvable:$true] %s837
          %843 = dma.vmem_to_hbm [thread:$0]  %s838, 2048, %s836, %s824, 128, 128, 8
        $region44: #{tpu_custom_call.1} parent=39 // pred_fallthru
          _
      $region40: #{tpu_custom_call.1} parent=5 // pred_fallthru
        _
      %p844 = scmp.le.s32.totalorder 2, %s14
      // Predicated region
      $region45: #{tpu_custom_call.1} parent=5 // pred_check
        %p845 = pneg %p844
      $region46: #{tpu_custom_call.1} parent=5 // pred_check_branch
        %847 = sbr.rel (%p845) target = $region48
      $region47: #{tpu_custom_call.1} parent=5 // pred_region
        %s848 = ssub.s32 %s14, 2
        // Predicated region
        $region49: #{tpu_custom_call.1} parent=47 // pred_check
          %p849 = pneg %p153
        $region50: #{tpu_custom_call.1} parent=47 // pred_check_branch
          %851 = sbr.rel (%p849) target = $region52
        $region51: #{tpu_custom_call.1} parent=47 // pred_region
          %s852 = sand.u32 %s138, 1
          %s853 = scalar_lea.sflag [#allocation3], %s852
          %s854 = sand.u32 %s138, 1
          %s855 = smul.addr %s854, 128
          %s856 = scalar_lea.vmem [#allocation2], %s855
          %857 = dma.done %s853, 2048
        $region52: #{tpu_custom_call.1} parent=47 // pred_fallthru
          _
      $region48: #{tpu_custom_call.1} parent=5 // pred_fallthru
        _
    $region6: #{tpu_custom_call.1} parent=1 // loop_footer
      %s18 = sadd.s32 1, %s14
    $region7: #{tpu_custom_call.1} parent=1 // loop_footer_branch
      %13 = sbr.rel target = $region3
    $region8: #{tpu_custom_call.1} parent=1 // loop_exit
      _
    %858 = vsyncpa [#allocation3], 1
    %s859 = scalar_lea.sflag [#allocation3], 1
    %860 = vsyncpa %s859, 1

// kernel: tpu_custom_call.1
$region0: #{tpu_custom_call.1}
  #allocation0 [shape = 'u32[]', space=smem, size = 0x4, offset = 0x4, fixed_abs, tag = 'smem constant byte address 0x4 - core index']
  #allocation1 [shape = 'u32[144,128]{1,0:T(1,128)}', space=vmem, size = 0x12000, scoped, tag = 'internal scratch']
  %s0 = inlined_call_operand.vmem [shape: f32[256,32], index: 0, kind: input, shape index: {}]
  %s1 = inlined_call_operand.vmem [shape: f32[32,128], index: 1, kind: input, shape index: {}]
  %s2 = inlined_call_operand.vmem [shape: f32[128,128], index: 2, kind: input, shape index: {}]
  %s3 = inlined_call_operand.vmem [shape: f32[128,128], index: 3, kind: input, shape index: {}]
  %s4 = inlined_call_operand.vmem [shape: f32[3,128], index: 4, kind: input, shape index: {}]
  %s5 = inlined_call_operand.hbm [shape: f32[256,128], index: 5, kind: output, shape index: {}]
  %s6 = sld [smem:[#allocation0]]
  $region53: #{tpu_custom_call.1} parent=0
    _
  %s8 = ssub.s32 1, %s6
  %s9 = scalar_select 0, %s8, %s6
  $region1: #{tpu_custom_call.1} parent=0
    #allocation2 [shape = 'u8[131072]{0}', space=vmem, size = 0x20000, scoped, tag = 'output window, operand 0']
    #allocation3 [shape = 's32[2]{0}', space=sflag, size = 0x8, scoped, tag = 'scoped memory for tpu_custom_call.1']
    %10 = vsyncpa [#allocation3], 0
    %s11 = scalar_lea.sflag [#allocation3], 1
    %12 = vsyncpa %s11, 0
    loop: start=0, step=1, limit=4
    $region2: #{tpu_custom_call.1} parent=1 // loop_pre_header
      _
    $region3: #{tpu_custom_call.1} parent=1 // loop_header
      %s14 = sphi 0, %s18
      %p15 = scmp.ge.s32.totalorder %s14, 4
      %s24 = sphi 0, %s26
      %s27 = sphi 0, %s24
      %s28 = sphi 0, %s27
      %s44 = sphi 0, %s28
      %s48 = sphi 0, %s48
      %s50 = sphi 0, %s48
      %s51 = sphi 0, %s50
      %s65 = sphi 0, %s51
      %s69 = sphi 0, %s69
      %s71 = sphi 0, %s69
      %s72 = sphi 0, %s71
      %s86 = sphi 0, %s72
      %s90 = sphi 0, %s90
      %s92 = sphi 0, %s90
      %s93 = sphi 0, %s92
      %s107 = sphi 0, %s93
      %s111 = sphi 0, %s111
      %s113 = sphi 0, %s111
      %s114 = sphi 0, %s113
      %s128 = sphi 0, %s114
      %s134 = sphi 0, %s136
      %s137 = sphi 0, %s134
      %s138 = sphi 0, %s137
      %s154 = sphi 0, %s138
    $region4: #{tpu_custom_call.1} parent=1 // loop_header_branch
      %17 = sbr.rel (%p15) target = $region8
    $region5: #{tpu_custom_call.1} parent=1 // loop_body
      %s19 = ssub.s32 %s14, 1
      %s20 = ssub.s32 %s14, 2
      %s21 = sadd.s32 %s14, 1
      %s22 = ssub.s32 %s14, %s21
      %p23 = scmp.eq.s32.totalorder %s22, 0
      %s25 = sadd.s32 %s24, 1
      %s26 = scalar_select %p23, %s24, %s25
      %p29 = pneg %p23
      %p30 = scmp.eq.s32.totalorder %s14, 1
      %p31 = por %p29, %p30
      %p32 = scmp.ne.s32.totalorder %s24, %s27
      %p33 = scmp.eq.s32.totalorder %s14, 0
      %p34 = por %p32, %p33
      %p35 = scmp.ne.s32.totalorder %s24, %s27
      %p36 = scmp.eq.s32.totalorder %s19, 1
      %p37 = por %p35, %p36
      %p38 = scmp.ne.s32.totalorder %s27, %s28
      %p39 = scmp.eq.s32.totalorder %s19, 0
      %p40 = por %p38, %p39
      %p41 = scmp.ne.s32.totalorder %s27, %s28
      %p42 = scmp.eq.s32.totalorder %s20, 1
      %p43 = por %p41, %p42
      %p45 = scmp.ne.s32.totalorder %s28, %s44
      %p46 = scmp.eq.s32.totalorder %s20, 0
      %p47 = por %p45, %p46
      %s49 = sadd.s32 %s48, 1
      %p52 = scmp.eq.s32.totalorder %s14, 1
      %p53 = scmp.ne.s32.totalorder %s48, %s50
      %p54 = scmp.eq.s32.totalorder %s14, 0
      %p55 = por %p53, %p54
      %p56 = scmp.ne.s32.totalorder %s48, %s50
      %p57 = scmp.eq.s32.totalorder %s19, 1
      %p58 = por %p56, %p57
      %p59 = scmp.ne.s32.totalorder %s50, %s51
      %p60 = scmp.eq.s32.totalorder %s19, 0
      %p61 = por %p59, %p60
      %p62 = scmp.ne.s32.totalorder %s50, %s51
      %p63 = scmp.eq.s32.totalorder %s20, 1
      %p64 = por %p62, %p63
      %p66 = scmp.ne.s32.totalorder %s51, %s65
      %p67 = scmp.eq.s32.totalorder %s20, 0
      %p68 = por %p66, %p67
      %s70 = sadd.s32 %s69, 1
      %p73 = scmp.eq.s32.totalorder %s14, 1
      %p74 = scmp.ne.s32.totalorder %s69, %s71
      %p75 = scmp.eq.s32.totalorder %s14, 0
      %p76 = por %p74, %p75
      %p77 = scmp.ne.s32.totalorder %s69, %s71
      %p78 = scmp.eq.s32.totalorder %s19, 1
      %p79 = por %p77, %p78
      %p80 = scmp.ne.s32.totalorder %s71, %s72
      %p81 = scmp.eq.s32.totalorder %s19, 0
      %p82 = por %p80, %p81
      %p83 = scmp.ne.s32.totalorder %s71, %s72
      %p84 = scmp.eq.s32.totalorder %s20, 1
      %p85 = por %p83, %p84
      %p87 = scmp.ne.s32.totalorder %s72, %s86
      %p88 = scmp.eq.s32.totalorder %s20, 0
      %p89 = por %p87, %p88
      %s91 = sadd.s32 %s90, 1
      %p94 = scmp.eq.s32.totalorder %s14, 1
      %p95 = scmp.ne.s32.totalorder %s90, %s92
      %p96 = scmp.eq.s32.totalorder %s14, 0
      %p97 = por %p95, %p96
      %p98 = scmp.ne.s32.totalorder %s90, %s92
      %p99 = scmp.eq.s32.totalorder %s19, 1
      %p100 = por %p98, %p99
      %p101 = scmp.ne.s32.totalorder %s92, %s93
      %p102 = scmp.eq.s32.totalorder %s19, 0
      %p103 = por %p101, %p102
      %p104 = scmp.ne.s32.totalorder %s92, %s93
      %p105 = scmp.eq.s32.totalorder %s20, 1
      %p106 = por %p104, %p105
      %p108 = scmp.ne.s32.totalorder %s93, %s107
      %p109 = scmp.eq.s32.totalorder %s20, 0
      %p110 = por %p108, %p109
      %s112 = sadd.s32 %s111, 1
      %p115 = scmp.eq.s32.totalorder %s14, 1
      %p116 = scmp.ne.s32.totalorder %s111, %s113
      %p117 = scmp.eq.s32.totalorder %s14, 0
      %p118 = por %p116, %p117
      %p119 = scmp.ne.s32.totalorder %s111, %s113
      %p120 = scmp.eq.s32.totalorder %s19, 1
      %p121 = por %p119, %p120
      %p122 = scmp.ne.s32.totalorder %s113, %s114
      %p123 = scmp.eq.s32.totalorder %s19, 0
      %p124 = por %p122, %p123
      %p125 = scmp.ne.s32.totalorder %s113, %s114
      %p126 = scmp.eq.s32.totalorder %s20, 1
      %p127 = por %p125, %p126
      %p129 = scmp.ne.s32.totalorder %s114, %s128
      %p130 = scmp.eq.s32.totalorder %s20, 0
      %p131 = por %p129, %p130
      %s132 = ssub.s32 %s14, %s21
      %p133 = scmp.eq.s32.totalorder %s132, 0
      %s135 = sadd.s32 %s134, 1
      %s136 = scalar_select %p133, %s134, %s135
      %p139 = pneg %p133
      %p140 = scmp.eq.s32.totalorder %s14, 1
      %p141 = por %p139, %p140
      %p142 = scmp.ne.s32.totalorder %s134, %s137
      %p143 = scmp.eq.s32.totalorder %s14, 0
      %p144 = por %p142, %p143
      %p145 = scmp.ne.s32.totalorder %s134, %s137
      %p146 = scmp.eq.s32.totalorder %s19, 1
      %p147 = por %p145, %p146
      %p148 = scmp.ne.s32.totalorder %s137, %s138
      %p149 = scmp.eq.s32.totalorder %s19, 0
      %p150 = por %p148, %p149
      %p151 = scmp.ne.s32.totalorder %s137, %s138
      %p152 = scmp.eq.s32.totalorder %s20, 1
      %p153 = por %p151, %p152
      %p155 = scmp.ne.s32.totalorder %s138, %s154
      %p156 = scmp.eq.s32.totalorder %s20, 0
      %p157 = por %p155, %p156
      %p158 = scmp.le.s32.totalorder 1, %s14
      %p159 = scmp.lt.s32.totalorder %s14, 3
      %p160 = pnand %p158, %p159
      %p161 = pneg %p160
      // Predicated region
      $region9: #{tpu_custom_call.1} parent=5 // pred_check
        _
      $region10: #{tpu_custom_call.1} parent=5 // pred_check_branch
        %163 = sbr.rel (%p160) target = $region12
      $region11: #{tpu_custom_call.1} parent=5 // pred_region
        %s164 = ssub.s32 %s14, 1
        // Predicated region
        $region13: #{tpu_custom_call.1} parent=11 // pred_check
          %p165 = pneg %p61
        $region14: #{tpu_custom_call.1} parent=11 // pred_check_branch
          %167 = sbr.rel (%p165) target = $region16
        $region15: #{tpu_custom_call.1} parent=11 // pred_region
          _
        $region16: #{tpu_custom_call.1} parent=11 // pred_fallthru
          _
        // Predicated region
        $region17: #{tpu_custom_call.1} parent=11 // pred_check
          %p168 = pneg %p82
        $region18: #{tpu_custom_call.1} parent=11 // pred_check_branch
          %170 = sbr.rel (%p168) target = $region20
        $region19: #{tpu_custom_call.1} parent=11 // pred_region
          _
        $region20: #{tpu_custom_call.1} parent=11 // pred_fallthru
          _
        // Predicated region
        $region21: #{tpu_custom_call.1} parent=11 // pred_check
          %p171 = pneg %p103
        $region22: #{tpu_custom_call.1} parent=11 // pred_check_branch
          %173 = sbr.rel (%p171) target = $region24
        $region23: #{tpu_custom_call.1} parent=11 // pred_region
          _
        $region24: #{tpu_custom_call.1} parent=11 // pred_fallthru
          _
        // Predicated region
        $region25: #{tpu_custom_call.1} parent=11 // pred_check
          %p174 = pneg %p124
        $region26: #{tpu_custom_call.1} parent=11 // pred_check_branch
          %176 = sbr.rel (%p174) target = $region28
        $region27: #{tpu_custom_call.1} parent=11 // pred_region
          _
        $region28: #{tpu_custom_call.1} parent=11 // pred_fallthru
          _
      $region12: #{tpu_custom_call.1} parent=5 // pred_fallthru
        _
      %p177 = scmp.lt.s32.totalorder %s14, 2
      // Predicated region
      $region29: #{tpu_custom_call.1} parent=5 // pred_check
        %p178 = pneg %p177
      $region30: #{tpu_custom_call.1} parent=5 // pred_check_branch
        %180 = sbr.rel (%p178) target = $region32
      $region31: #{tpu_custom_call.1} parent=5 // pred_region
        // Predicated region
        $region33: #{tpu_custom_call.1} parent=31 // pred_check
          %p181 = pneg %p34
        $region34: #{tpu_custom_call.1} parent=31 // pred_check_branch
          %183 = sbr.rel (%p181) target = $region36
        $region35: #{tpu_custom_call.1} parent=31 // pred_region
          %s184 = smul.u32 16, %s14
          %p185 = scmp.lt.s32.totalorder %s184, 31
          %s186 = scalar_select %p185, %s184, 31
          %s187 = smul.addr %s186, 8
          %s188 = scalar_lea.vmem %s0, %s187
          %s189 = smul.u32 16, %s14
        $region36: #{tpu_custom_call.1} parent=31 // pred_fallthru
          _
      $region32: #{tpu_custom_call.1} parent=5 // pred_fallthru
        _
      %p190 = scmp.le.s32.totalorder 1, %s14
      %p191 = scmp.lt.s32.totalorder %s14, 3
      %p192 = pnand %p190, %p191
      %p193 = pneg %p192
      // Predicated region
      $region37: #{tpu_custom_call.1} parent=5 // pred_check
        _
      $region38: #{tpu_custom_call.1} parent=5 // pred_check_branch
        %195 = sbr.rel (%p192) target = $region40
      $region39: #{tpu_custom_call.1} parent=5 // pred_region
        %s196 = ssub.s32 %s14, 1
        %s197 = smul.u32 16, %s19
        %p198 = scmp.lt.s32.totalorder %s197, 31
        %s199 = scalar_select %p198, %s197, 31
        %s200 = smul.addr %s199, 8
        %s201 = scalar_lea.vmem %s0, %s200
        %p202 = pneg %p40
        %p203 = pneg %p37
        %p204 = pneg %p61
        %p205 = pneg %p58
        %p206 = pneg %p82
        %p207 = pneg %p79
        %p208 = pneg %p103
        %p209 = pneg %p100
        %p210 = pneg %p124
        %p211 = pneg %p121
        %p212 = pneg %p150
        %p213 = pneg %p147
        %s214 = sand.u32 %s137, 1
        %s215 = scalar_lea.sflag [#allocation3], %s214
        %s216 = sand.u32 %s137, 1
        %s217 = smul.addr %s216, 128
        %s218 = scalar_lea.vmem [#allocation2], %s217
        %s219 = smul.u32 16, %s19
        %p220 = scmp.lt.s32.totalorder %s219, 31
        %s221 = scalar_select %p220, %s219, 31
        %s222 = smul.addr %s221, 8
        %s223 = scalar_lea.vmem %s0, %s222
        %s224 = smul.u32 16, %s19
        %s225 = smul.u32 16, %s19
        %v226 = vld [vmem:[%s223] sm:$0xff]
        %v227 = vld [vmem:[%s223 + $0x8] sm:$0xff]
        %v228 = vld [vmem:[%s223 + $0x10] sm:$0xff]
        %v229 = vld [vmem:[%s223 + $0x18] sm:$0xff]
        %v230 = vld [vmem:[%s223 + $0x20] sm:$0xff]
        %v231 = vld [vmem:[%s223 + $0x28] sm:$0xff]
        %v232 = vld [vmem:[%s223 + $0x30] sm:$0xff]
        %v233 = vld [vmem:[%s223 + $0x38] sm:$0xff]
        %v234 = vld [vmem:[%s223 + $0x40] sm:$0xff]
        %v235 = vld [vmem:[%s223 + $0x48] sm:$0xff]
        %v236 = vld [vmem:[%s223 + $0x50] sm:$0xff]
        %v237 = vld [vmem:[%s223 + $0x58] sm:$0xff]
        %v238 = vld [vmem:[%s223 + $0x60] sm:$0xff]
        %v239 = vld [vmem:[%s223 + $0x68] sm:$0xff]
        %v240 = vld [vmem:[%s223 + $0x70] sm:$0xff]
        %v241 = vld [vmem:[%s223 + $0x78] sm:$0xff]
        %v242 = vld [vmem:[%s4] sm:$0x7]
        %v243 = vld [vmem:[%s1] sm:$0xff]
        %v244 = vld [vmem:[%s1 + $0x8] sm:$0xff]
        %v245 = vld [vmem:[%s1 + $0x10] sm:$0xff]
        %v246 = vld [vmem:[%s1 + $0x18] sm:$0xff]
        %v247 = vlaneseq
        %v248 = vshrl.u32 %v247, 7
        %v249 = vsub.s32 0, %v248
        %v250 = vrot.slane %v242, %v249
        %vm251 = vcmask 261120
        %v253 = vsel %vm251, %v226, 0
        %v256 = vsel %vm251, %v227, 0
        %v259 = vsel %vm251, %v228, 0
        %v262 = vsel %vm251, %v229, 0
        %v265 = vsel %vm251, %v230, 0
        %v268 = vsel %vm251, %v231, 0
        %v271 = vsel %vm251, %v232, 0
        %v274 = vsel %vm251, %v233, 0
        %v277 = vsel %vm251, %v234, 0
        %v280 = vsel %vm251, %v235, 0
        %v283 = vsel %vm251, %v236, 0
        %v286 = vsel %vm251, %v237, 0
        %v289 = vsel %vm251, %v238, 0
        %v292 = vsel %vm251, %v239, 0
        %v295 = vsel %vm251, %v240, 0
        %v298 = vsel %vm251, %v241, 0
        %300 = vmatprep.subr.mxu0 0.0
        %301 = vmatpush1.msra.mxu0 %v243
        %302 = vmatprep.subr.mxu0 0.0
        %303 = vmatpush1.msra.mxu0 %v244
        %304 = vmatprep.subr.mxu0 0.0
        %305 = vmatpush1.msra.mxu0 %v245
        %306 = vmatprep.subr.mxu0 0.0
        %307 = vmatpush1.msra.mxu0 %v246
        %308 = vmatprep.subr.mxu0 0.0
        %309 = vmatpush1.msra.mxu0 0.0
        %310 = vmatprep.subr.mxu0 0.0
        %311 = vmatpush1.msra.mxu0 0.0
        %312 = vmatprep.subr.mxu0 0.0
        %313 = vmatpush1.msra.mxu0 0.0
        %314 = vmatprep.subr.mxu0 0.0
        %315 = vmatpush1.msra.mxu0 0.0
        %316 = vmatprep.subr.mxu0 0.0
        %317 = vmatpush1.msra.mxu0 0.0
        %318 = vmatprep.subr.mxu0 0.0
        %319 = vmatpush1.msra.mxu0 0.0
        %320 = vmatprep.subr.mxu0 0.0
        %321 = vmatpush1.msra.mxu0 0.0
        %322 = vmatprep.subr.mxu0 0.0
        %323 = vmatpush1.msra.mxu0 0.0
        %324 = vmatprep.subr.mxu0 0.0
        %325 = vmatpush1.msra.mxu0 0.0
        %326 = vmatprep.subr.mxu0 0.0
        %327 = vmatpush1.msra.mxu0 0.0
        %328 = vmatprep.subr.mxu0 0.0
        %329 = vmatpush1.msra.mxu0 0.0
        %330 = vmatprep.subr.mxu0 0.0
        %331 = vmatpush1.msra.mxu0 0.0
        %332 = vmatprep.subr.mxu0 0.0
        %333 = vmatpush1.msra.mxu0 0.0
        %334 = vmatprep.subr.mxu0 0.0
        %335 = vmatpush1.msra.mxu0 0.0
        %336 = vmatprep.subr.mxu0 0.0
        %337 = vmatpush1.msra.mxu0 0.0
        %338 = vmatprep.subr.mxu0 0.0
        %339 = vmatpush1.msra.mxu0 0.0
        %340 = vmatprep.subr.mxu0 0.0
        %341 = vmatpush1.msra.mxu0 0.0
        %342 = vmatprep.subr.mxu0 0.0
        %343 = vmatpush1.msra.mxu0 0.0
        %344 = vmatprep.subr.mxu0 0.0
        %345 = vmatpush1.msra.mxu0 0.0
        %346 = vmatprep.subr.mxu0 0.0
        %347 = vmatpush1.msra.mxu0 0.0
        %348 = vmatprep.subr.mxu0 0.0
        %349 = vmatpush1.msra.mxu0 0.0
        %350 = vmatprep.subr.mxu0 0.0
        %351 = vmatpush1.msra.mxu0 0.0
        %352 = vmatprep.subr.mxu0 0.0
        %353 = vmatpush1.msra.mxu0 0.0
        %354 = vmatprep.subr.mxu0 0.0
        %355 = vmatpush1.msra.mxu0 0.0
        %356 = vmatprep.subr.mxu0 0.0
        %357 = vmatpush1.msra.mxu0 0.0
        %358 = vmatprep.subr.mxu0 0.0
        %359 = vmatpush1.msra.mxu0 0.0
        %360 = vmatprep.subr.mxu0 0.0
        %361 = vmatpush1.msra.mxu0 0.0
        %362 = vmatprep.subr.mxu0 0.0
        %363 = vmatpush1.msra.mxu0 0.0
        %364 = vmatprep.mubr.f32.mxu0 0.0
        %365 = vmatmul.mubr.f32.gmra.mrb[0].mxu0 %v253
        %v366 = vpop.f32.mrb[0].mxu0
        %v367 = vadd.f32 %v250, %v366
        %v368 = vpop.f32.mrb[0].mxu0
        %369 = vmatprep.mubr.f32.mxu0 0.0
        %370 = vmatmul.mubr.f32.gmra.mrb[0].mxu0 %v256
        %v371 = vpop.f32.mrb[0].mxu0
        %v372 = vadd.f32 %v250, %v371
        %v373 = vpop.f32.mrb[0].mxu0
        %374 = vmatprep.mubr.f32.mxu0 0.0
        %375 = vmatmul.mubr.f32.gmra.mrb[0].mxu0 %v259
        %v376 = vpop.f32.mrb[0].mxu0
        %v377 = vadd.f32 %v250, %v376
        %v378 = vpop.f32.mrb[0].mxu0
        %379 = vmatprep.mubr.f32.mxu0 0.0
        %380 = vmatmul.mubr.f32.gmra.mrb[0].mxu0 %v262
        %v381 = vpop.f32.mrb[0].mxu0
        %v382 = vadd.f32 %v250, %v381
        %v383 = vpop.f32.mrb[0].mxu0
        %384 = vmatprep.mubr.f32.mxu0 0.0
        %385 = vmatmul.mubr.f32.gmra.mrb[0].mxu0 %v265
        %v386 = vpop.f32.mrb[0].mxu0
        %v387 = vadd.f32 %v250, %v386
        %v388 = vpop.f32.mrb[0].mxu0
        %389 = vmatprep.mubr.f32.mxu0 0.0
        %390 = vmatmul.mubr.f32.gmra.mrb[0].mxu0 %v268
        %v391 = vpop.f32.mrb[0].mxu0
        %v392 = vadd.f32 %v250, %v391
        %v393 = vpop.f32.mrb[0].mxu0
        %394 = vmatprep.mubr.f32.mxu0 0.0
        %395 = vmatmul.mubr.f32.gmra.mrb[0].mxu0 %v271
        %v396 = vpop.f32.mrb[0].mxu0
        %v397 = vadd.f32 %v250, %v396
        %v398 = vpop.f32.mrb[0].mxu0
        %399 = vmatprep.mubr.f32.mxu0 0.0
        %400 = vmatmul.mubr.f32.gmra.mrb[0].mxu0 %v274
        %v401 = vpop.f32.mrb[0].mxu0
        %v402 = vadd.f32 %v250, %v401
        %v403 = vpop.f32.mrb[0].mxu0
        %404 = vmatprep.mubr.f32.mxu0 0.0
        %405 = vmatmul.mubr.f32.gmra.mrb[0].mxu0 %v277
        %v406 = vpop.f32.mrb[0].mxu0
        %v407 = vadd.f32 %v250, %v406
        %v408 = vpop.f32.mrb[0].mxu0
        %409 = vmatprep.mubr.f32.mxu0 0.0
        %410 = vmatmul.mubr.f32.gmra.mrb[0].mxu0 %v280
        %v411 = vpop.f32.mrb[0].mxu0
        %v412 = vadd.f32 %v250, %v411
        %v413 = vpop.f32.mrb[0].mxu0
        %414 = vmatprep.mubr.f32.mxu0 0.0
        %415 = vmatmul.mubr.f32.gmra.mrb[0].mxu0 %v283
        %v416 = vpop.f32.mrb[0].mxu0
        %v417 = vadd.f32 %v250, %v416
        %v418 = vpop.f32.mrb[0].mxu0
        %419 = vmatprep.mubr.f32.mxu0 0.0
        %420 = vmatmul.mubr.f32.gmra.mrb[0].mxu0 %v286
        %v421 = vpop.f32.mrb[0].mxu0
        %v422 = vadd.f32 %v250, %v421
        %v423 = vpop.f32.mrb[0].mxu0
        %424 = vmatprep.mubr.f32.mxu0 0.0
        %425 = vmatmul.mubr.f32.gmra.mrb[0].mxu0 %v289
        %v426 = vpop.f32.mrb[0].mxu0
        %v427 = vadd.f32 %v250, %v426
        %v428 = vpop.f32.mrb[0].mxu0
        %429 = vmatprep.mubr.f32.mxu0 0.0
        %430 = vmatmul.mubr.f32.gmra.mrb[0].mxu0 %v292
        %v431 = vpop.f32.mrb[0].mxu0
        %v432 = vadd.f32 %v250, %v431
        %v433 = vpop.f32.mrb[0].mxu0
        %434 = vmatprep.mubr.f32.mxu0 0.0
        %435 = vmatmul.mubr.f32.gmra.mrb[0].mxu0 %v295
        %v436 = vpop.f32.mrb[0].mxu0
        %v437 = vadd.f32 %v250, %v436
        %v438 = vpop.f32.mrb[0].mxu0
        %439 = vmatprep.mubr.f32.mxu0 0.0
        %440 = vmatmul.mubr.f32.gmra.mrb[0].mxu0 %v298
        %v441 = vpop.f32.mrb[0].mxu0
        %v442 = vadd.f32 %v250, %v441
        %v443 = vpop.f32.mrb[0].mxu0
        %444 = vdwg.mxu0
        %v445 = vmax.f32 %v367, 0.0
        %v446 = vmax.f32 %v372, 0.0
        %v447 = vmax.f32 %v377, 0.0
        %v448 = vmax.f32 %v382, 0.0
        %v449 = vmax.f32 %v387, 0.0
        %v450 = vmax.f32 %v392, 0.0
        %v451 = vmax.f32 %v397, 0.0
        %v452 = vmax.f32 %v402, 0.0
        %v453 = vmax.f32 %v407, 0.0
        %v454 = vmax.f32 %v412, 0.0
        %v455 = vmax.f32 %v417, 0.0
        %v456 = vmax.f32 %v422, 0.0
        %v457 = vmax.f32 %v427, 0.0
        %v458 = vmax.f32 %v432, 0.0
        %v459 = vmax.f32 %v437, 0.0
        %v460 = vmax.f32 %v442, 0.0
        %v461 = vld [vmem:[%s2] sm:$0xff]
        %v462 = vld [vmem:[%s2 + $0x8] sm:$0xff]
        %v463 = vld [vmem:[%s2 + $0x10] sm:$0xff]
        %v464 = vld [vmem:[%s2 + $0x18] sm:$0xff]
        %v465 = vld [vmem:[%s2 + $0x20] sm:$0xff]
        %v466 = vld [vmem:[%s2 + $0x28] sm:$0xff]
        %v467 = vld [vmem:[%s2 + $0x30] sm:$0xff]
        %v468 = vld [vmem:[%s2 + $0x38] sm:$0xff]
        %v469 = vld [vmem:[%s2 + $0x40] sm:$0xff]
        %v470 = vld [vmem:[%s2 + $0x48] sm:$0xff]
        %v471 = vld [vmem:[%s2 + $0x50] sm:$0xff]
        %v472 = vld [vmem:[%s2 + $0x58] sm:$0xff]
        %v473 = vld [vmem:[%s2 + $0x60] sm:$0xff]
        %v474 = vld [vmem:[%s2 + $0x68] sm:$0xff]
        %v475 = vld [vmem:[%s2 + $0x70] sm:$0xff]
        %v476 = vld [vmem:[%s2 + $0x78] sm:$0xff]
        %v477 = vlaneseq
        %v478 = vshrl.u32 %v477, 7
        %v479 = vsub.s32 1, %v478
        %v480 = vrot.slane %v242, %v479
        %481 = vmatprep.subr.mxu0 0.0
        %482 = vmatpush1.msra.mxu0 %v461
        %483 = vmatprep.subr.mxu0 0.0
        %484 = vmatpush1.msra.mxu0 %v462
        %485 = vmatprep.subr.mxu0 0.0
        %486 = vmatpush1.msra.mxu0 %v463
        %487 = vmatprep.subr.mxu0 0.0
        %488 = vmatpush1.msra.mxu0 %v464
        %489 = vmatprep.subr.mxu0 0.0
        %490 = vmatpush1.msra.mxu0 %v465
        %491 = vmatprep.subr.mxu0 0.0
        %492 = vmatpush1.msra.mxu0 %v466
        %493 = vmatprep.subr.mxu0 0.0
        %494 = vmatpush1.msra.mxu0 %v467
        %495 = vmatprep.subr.mxu0 0.0
        %496 = vmatpush1.msra.mxu0 %v468
        %497 = vmatprep.subr.mxu0 0.0
        %498 = vmatpush1.msra.mxu0 %v469
        %499 = vmatprep.subr.mxu0 0.0
        %500 = vmatpush1.msra.mxu0 %v470
        %501 = vmatprep.subr.mxu0 0.0
        %502 = vmatpush1.msra.mxu0 %v471
        %503 = vmatprep.subr.mxu0 0.0
        %504 = vmatpush1.msra.mxu0 %v472
        %505 = vmatprep.subr.mxu0 0.0
        %506 = vmatpush1.msra.mxu0 %v473
        %507 = vmatprep.subr.mxu0 0.0
        %508 = vmatpush1.msra.mxu0 %v474
        %509 = vmatprep.subr.mxu0 0.0
        %510 = vmatpush1.msra.mxu0 %v475
        %511 = vmatprep.subr.mxu0 0.0
        %512 = vmatpush1.msra.mxu0 %v476
        %513 = vmatprep.subr.mxu0 0.0
        %514 = vmatpush1.msra.mxu0 0.0
        %515 = vmatprep.subr.mxu0 0.0
        %516 = vmatpush1.msra.mxu0 0.0
        %517 = vmatprep.subr.mxu0 0.0
        %518 = vmatpush1.msra.mxu0 0.0
        %519 = vmatprep.subr.mxu0 0.0
        %520 = vmatpush1.msra.mxu0 0.0
        %521 = vmatprep.subr.mxu0 0.0
        %522 = vmatpush1.msra.mxu0 0.0
        %523 = vmatprep.subr.mxu0 0.0
        %524 = vmatpush1.msra.mxu0 0.0
        %525 = vmatprep.subr.mxu0 0.0
        %526 = vmatpush1.msra.mxu0 0.0
        %527 = vmatprep.subr.mxu0 0.0
        %528 = vmatpush1.msra.mxu0 0.0
        %529 = vmatprep.subr.mxu0 0.0
        %530 = vmatpush1.msra.mxu0 0.0
        %531 = vmatprep.subr.mxu0 0.0
        %532 = vmatpush1.msra.mxu0 0.0
        %533 = vmatprep.subr.mxu0 0.0
        %534 = vmatpush1.msra.mxu0 0.0
        %535 = vmatprep.subr.mxu0 0.0
        %536 = vmatpush1.msra.mxu0 0.0
        %537 = vmatprep.subr.mxu0 0.0
        %538 = vmatpush1.msra.mxu0 0.0
        %539 = vmatprep.subr.mxu0 0.0
        %540 = vmatpush1.msra.mxu0 0.0
        %541 = vmatprep.subr.mxu0 0.0
        %542 = vmatpush1.msra.mxu0 0.0
        %543 = vmatprep.subr.mxu0 0.0
        %544 = vmatpush1.msra.mxu0 0.0
        %545 = vmatprep.mubr.f32.mxu0 0.0
        %546 = vmatmul.mubr.f32.gmra.mrb[0].mxu0 %v445
        %v547 = vpop.f32.mrb[0].mxu0
        %v548 = vadd.f32 %v480, %v547
        %v549 = vpop.f32.mrb[0].mxu0
        %550 = vmatprep.mubr.f32.mxu0 0.0
        %551 = vmatmul.mubr.f32.gmra.mrb[0].mxu0 %v446
        %v552 = vpop.f32.mrb[0].mxu0
        %v553 = vadd.f32 %v480, %v552
        %v554 = vpop.f32.mrb[0].mxu0
        %555 = vmatprep.mubr.f32.mxu0 0.0
        %556 = vmatmul.mubr.f32.gmra.mrb[0].mxu0 %v447
        %v557 = vpop.f32.mrb[0].mxu0
        %v558 = vadd.f32 %v480, %v557
        %v559 = vpop.f32.mrb[0].mxu0
        %560 = vmatprep.mubr.f32.mxu0 0.0
        %561 = vmatmul.mubr.f32.gmra.mrb[0].mxu0 %v448
        %v562 = vpop.f32.mrb[0].mxu0
        %v563 = vadd.f32 %v480, %v562
        %v564 = vpop.f32.mrb[0].mxu0
        %565 = vmatprep.mubr.f32.mxu0 0.0
        %566 = vmatmul.mubr.f32.gmra.mrb[0].mxu0 %v449
        %v567 = vpop.f32.mrb[0].mxu0
        %v568 = vadd.f32 %v480, %v567
        %v569 = vpop.f32.mrb[0].mxu0
        %570 = vmatprep.mubr.f32.mxu0 0.0
        %571 = vmatmul.mubr.f32.gmra.mrb[0].mxu0 %v450
        %v572 = vpop.f32.mrb[0].mxu0
        %v573 = vadd.f32 %v480, %v572
        %v574 = vpop.f32.mrb[0].mxu0
        %575 = vmatprep.mubr.f32.mxu0 0.0
        %576 = vmatmul.mubr.f32.gmra.mrb[0].mxu0 %v451
        %v577 = vpop.f32.mrb[0].mxu0
        %v578 = vadd.f32 %v480, %v577
        %v579 = vpop.f32.mrb[0].mxu0
        %580 = vmatprep.mubr.f32.mxu0 0.0
        %581 = vmatmul.mubr.f32.gmra.mrb[0].mxu0 %v452
        %v582 = vpop.f32.mrb[0].mxu0
        %v583 = vadd.f32 %v480, %v582
        %v584 = vpop.f32.mrb[0].mxu0
        %585 = vmatprep.mubr.f32.mxu0 0.0
        %586 = vmatmul.mubr.f32.gmra.mrb[0].mxu0 %v453
        %v587 = vpop.f32.mrb[0].mxu0
        %v588 = vadd.f32 %v480, %v587
        %v589 = vpop.f32.mrb[0].mxu0
        %590 = vmatprep.mubr.f32.mxu0 0.0
        %591 = vmatmul.mubr.f32.gmra.mrb[0].mxu0 %v454
        %v592 = vpop.f32.mrb[0].mxu0
        %v593 = vadd.f32 %v480, %v592
        %v594 = vpop.f32.mrb[0].mxu0
        %595 = vmatprep.mubr.f32.mxu0 0.0
        %596 = vmatmul.mubr.f32.gmra.mrb[0].mxu0 %v455
        %v597 = vpop.f32.mrb[0].mxu0
        %v598 = vadd.f32 %v480, %v597
        %v599 = vpop.f32.mrb[0].mxu0
        %600 = vmatprep.mubr.f32.mxu0 0.0
        %601 = vmatmul.mubr.f32.gmra.mrb[0].mxu0 %v456
        %v602 = vpop.f32.mrb[0].mxu0
        %v603 = vadd.f32 %v480, %v602
        %v604 = vpop.f32.mrb[0].mxu0
        %605 = vmatprep.mubr.f32.mxu0 0.0
        %606 = vmatmul.mubr.f32.gmra.mrb[0].mxu0 %v457
        %v607 = vpop.f32.mrb[0].mxu0
        %v608 = vadd.f32 %v480, %v607
        %v609 = vpop.f32.mrb[0].mxu0
        %610 = vmatprep.mubr.f32.mxu0 0.0
        %611 = vmatmul.mubr.f32.gmra.mrb[0].mxu0 %v458
        %v612 = vpop.f32.mrb[0].mxu0
        %v613 = vadd.f32 %v480, %v612
        %v614 = vpop.f32.mrb[0].mxu0
        %615 = vmatprep.mubr.f32.mxu0 0.0
        %616 = vmatmul.mubr.f32.gmra.mrb[0].mxu0 %v459
        %v617 = vpop.f32.mrb[0].mxu0
        %v618 = vadd.f32 %v480, %v617
        %v619 = vpop.f32.mrb[0].mxu0
        %620 = vmatprep.mubr.f32.mxu0 0.0
        %621 = vmatmul.mubr.f32.gmra.mrb[0].mxu0 %v460
        %v622 = vpop.f32.mrb[0].mxu0
        %v623 = vadd.f32 %v480, %v622
        %v624 = vpop.f32.mrb[0].mxu0
        %625 = vdwg.mxu0
        %v626 = vmax.f32 %v548, 0.0
        %v627 = vmax.f32 %v553, 0.0
        %v628 = vmax.f32 %v558, 0.0
        %v629 = vmax.f32 %v563, 0.0
        %v630 = vmax.f32 %v568, 0.0
        %v631 = vmax.f32 %v573, 0.0
        %v632 = vmax.f32 %v578, 0.0
        %v633 = vmax.f32 %v583, 0.0
        %v634 = vmax.f32 %v588, 0.0
        %v635 = vmax.f32 %v593, 0.0
        %v636 = vmax.f32 %v598, 0.0
        %v637 = vmax.f32 %v603, 0.0
        %v638 = vmax.f32 %v608, 0.0
        %v639 = vmax.f32 %v613, 0.0
        %v640 = vmax.f32 %v618, 0.0
        %v641 = vmax.f32 %v623, 0.0
        %v642 = vld [vmem:[%s3] sm:$0xff]
        %v643 = vld [vmem:[%s3 + $0x8] sm:$0xff]
        %v644 = vld [vmem:[%s3 + $0x10] sm:$0xff]
        %v645 = vld [vmem:[%s3 + $0x18] sm:$0xff]
        %v646 = vld [vmem:[%s3 + $0x20] sm:$0xff]
        %v647 = vld [vmem:[%s3 + $0x28] sm:$0xff]
        %v648 = vld [vmem:[%s3 + $0x30] sm:$0xff]
        %v649 = vld [vmem:[%s3 + $0x38] sm:$0xff]
        %v650 = vld [vmem:[%s3 + $0x40] sm:$0xff]
        %v651 = vld [vmem:[%s3 + $0x48] sm:$0xff]
        %v652 = vld [vmem:[%s3 + $0x50] sm:$0xff]
        %v653 = vld [vmem:[%s3 + $0x58] sm:$0xff]
        %v654 = vld [vmem:[%s3 + $0x60] sm:$0xff]
        %v655 = vld [vmem:[%s3 + $0x68] sm:$0xff]
        %v656 = vld [vmem:[%s3 + $0x70] sm:$0xff]
        %v657 = vld [vmem:[%s3 + $0x78] sm:$0xff]
        %v658 = vlaneseq
        %v659 = vshrl.u32 %v658, 7
        %v660 = vsub.s32 2, %v659
        %v661 = vrot.slane %v242, %v660
        %662 = vmatprep.subr.mxu0 0.0
        %663 = vmatpush1.msra.mxu0 %v642
        %664 = vmatprep.subr.mxu0 0.0
        %665 = vmatpush1.msra.mxu0 %v643
        %666 = vmatprep.subr.mxu0 0.0
        %667 = vmatpush1.msra.mxu0 %v644
        %668 = vmatprep.subr.mxu0 0.0
        %669 = vmatpush1.msra.mxu0 %v645
        %670 = vmatprep.subr.mxu0 0.0
        %671 = vmatpush1.msra.mxu0 %v646
        %672 = vmatprep.subr.mxu0 0.0
        %673 = vmatpush1.msra.mxu0 %v647
        %674 = vmatprep.subr.mxu0 0.0
        %675 = vmatpush1.msra.mxu0 %v648
        %676 = vmatprep.subr.mxu0 0.0
        %677 = vmatpush1.msra.mxu0 %v649
        %678 = vmatprep.subr.mxu0 0.0
        %679 = vmatpush1.msra.mxu0 %v650
        %680 = vmatprep.subr.mxu0 0.0
        %681 = vmatpush1.msra.mxu0 %v651
        %682 = vmatprep.subr.mxu0 0.0
        %683 = vmatpush1.msra.mxu0 %v652
        %684 = vmatprep.subr.mxu0 0.0
        %685 = vmatpush1.msra.mxu0 %v653
        %686 = vmatprep.subr.mxu0 0.0
        %687 = vmatpush1.msra.mxu0 %v654
        %688 = vmatprep.subr.mxu0 0.0
        %689 = vmatpush1.msra.mxu0 %v655
        %690 = vmatprep.subr.mxu0 0.0
        %691 = vmatpush1.msra.mxu0 %v656
        %692 = vmatprep.subr.mxu0 0.0
        %693 = vmatpush1.msra.mxu0 %v657
        %694 = vmatprep.subr.mxu0 0.0
        %695 = vmatpush1.msra.mxu0 0.0
        %696 = vmatprep.subr.mxu0 0.0
        %697 = vmatpush1.msra.mxu0 0.0
        %698 = vmatprep.subr.mxu0 0.0
        %699 = vmatpush1.msra.mxu0 0.0
        %700 = vmatprep.subr.mxu0 0.0
        %701 = vmatpush1.msra.mxu0 0.0
        %702 = vmatprep.subr.mxu0 0.0
        %703 = vmatpush1.msra.mxu0 0.0
        %704 = vmatprep.subr.mxu0 0.0
        %705 = vmatpush1.msra.mxu0 0.0
        %706 = vmatprep.subr.mxu0 0.0
        %707 = vmatpush1.msra.mxu0 0.0
        %708 = vmatprep.subr.mxu0 0.0
        %709 = vmatpush1.msra.mxu0 0.0
        %710 = vmatprep.subr.mxu0 0.0
        %711 = vmatpush1.msra.mxu0 0.0
        %712 = vmatprep.subr.mxu0 0.0
        %713 = vmatpush1.msra.mxu0 0.0
        %714 = vmatprep.subr.mxu0 0.0
        %715 = vmatpush1.msra.mxu0 0.0
        %716 = vmatprep.subr.mxu0 0.0
        %717 = vmatpush1.msra.mxu0 0.0
        %718 = vmatprep.subr.mxu0 0.0
        %719 = vmatpush1.msra.mxu0 0.0
        %720 = vmatprep.subr.mxu0 0.0
        %721 = vmatpush1.msra.mxu0 0.0
        %722 = vmatprep.subr.mxu0 0.0
        %723 = vmatpush1.msra.mxu0 0.0
        %724 = vmatprep.subr.mxu0 0.0
        %725 = vmatpush1.msra.mxu0 0.0
        %726 = vmatprep.mubr.f32.mxu0 0.0
        %727 = vmatmul.mubr.f32.gmra.mrb[0].mxu0 %v626
        %v728 = vpop.f32.mrb[0].mxu0
        %v729 = vadd.f32 %v661, %v728
        %v730 = vpop.f32.mrb[0].mxu0
        %731 = vmatprep.mubr.f32.mxu0 0.0
        %732 = vmatmul.mubr.f32.gmra.mrb[0].mxu0 %v627
        %v733 = vpop.f32.mrb[0].mxu0
        %v734 = vadd.f32 %v661, %v733
        %v735 = vpop.f32.mrb[0].mxu0
        %736 = vmatprep.mubr.f32.mxu0 0.0
        %737 = vmatmul.mubr.f32.gmra.mrb[0].mxu0 %v628
        %v738 = vpop.f32.mrb[0].mxu0
        %v739 = vadd.f32 %v661, %v738
        %v740 = vpop.f32.mrb[0].mxu0
        %741 = vmatprep.mubr.f32.mxu0 0.0
        %742 = vmatmul.mubr.f32.gmra.mrb[0].mxu0 %v629
        %v743 = vpop.f32.mrb[0].mxu0
        %v744 = vadd.f32 %v661, %v743
        %v745 = vpop.f32.mrb[0].mxu0
        %746 = vmatprep.mubr.f32.mxu0 0.0
        %747 = vmatmul.mubr.f32.gmra.mrb[0].mxu0 %v630
        %v748 = vpop.f32.mrb[0].mxu0
        %v749 = vadd.f32 %v661, %v748
        %v750 = vpop.f32.mrb[0].mxu0
        %751 = vmatprep.mubr.f32.mxu0 0.0
        %752 = vmatmul.mubr.f32.gmra.mrb[0].mxu0 %v631
        %v753 = vpop.f32.mrb[0].mxu0
        %v754 = vadd.f32 %v661, %v753
        %v755 = vpop.f32.mrb[0].mxu0
        %756 = vmatprep.mubr.f32.mxu0 0.0
        %757 = vmatmul.mubr.f32.gmra.mrb[0].mxu0 %v632
        %v758 = vpop.f32.mrb[0].mxu0
        %v759 = vadd.f32 %v661, %v758
        %v760 = vpop.f32.mrb[0].mxu0
        %761 = vmatprep.mubr.f32.mxu0 0.0
        %762 = vmatmul.mubr.f32.gmra.mrb[0].mxu0 %v633
        %v763 = vpop.f32.mrb[0].mxu0
        %v764 = vadd.f32 %v661, %v763
        %v765 = vpop.f32.mrb[0].mxu0
        %766 = vmatprep.mubr.f32.mxu0 0.0
        %767 = vmatmul.mubr.f32.gmra.mrb[0].mxu0 %v634
        %v768 = vpop.f32.mrb[0].mxu0
        %v769 = vadd.f32 %v661, %v768
        %v770 = vpop.f32.mrb[0].mxu0
        %771 = vmatprep.mubr.f32.mxu0 0.0
        %772 = vmatmul.mubr.f32.gmra.mrb[0].mxu0 %v635
        %v773 = vpop.f32.mrb[0].mxu0
        %v774 = vadd.f32 %v661, %v773
        %v775 = vpop.f32.mrb[0].mxu0
        %776 = vmatprep.mubr.f32.mxu0 0.0
        %777 = vmatmul.mubr.f32.gmra.mrb[0].mxu0 %v636
        %v778 = vpop.f32.mrb[0].mxu0
        %v779 = vadd.f32 %v661, %v778
        %v780 = vpop.f32.mrb[0].mxu0
        %781 = vmatprep.mubr.f32.mxu0 0.0
        %782 = vmatmul.mubr.f32.gmra.mrb[0].mxu0 %v637
        %v783 = vpop.f32.mrb[0].mxu0
        %v784 = vadd.f32 %v661, %v783
        %v785 = vpop.f32.mrb[0].mxu0
        %786 = vmatprep.mubr.f32.mxu0 0.0
        %787 = vmatmul.mubr.f32.gmra.mrb[0].mxu0 %v638
        %v788 = vpop.f32.mrb[0].mxu0
        %v789 = vadd.f32 %v661, %v788
        %v790 = vpop.f32.mrb[0].mxu0
        %791 = vmatprep.mubr.f32.mxu0 0.0
        %792 = vmatmul.mubr.f32.gmra.mrb[0].mxu0 %v639
        %v793 = vpop.f32.mrb[0].mxu0
        %v794 = vadd.f32 %v661, %v793
        %v795 = vpop.f32.mrb[0].mxu0
        %796 = vmatprep.mubr.f32.mxu0 0.0
        %797 = vmatmul.mubr.f32.gmra.mrb[0].mxu0 %v640
        %v798 = vpop.f32.mrb[0].mxu0
        %v799 = vadd.f32 %v661, %v798
        %v800 = vpop.f32.mrb[0].mxu0
        %801 = vmatprep.mubr.f32.mxu0 0.0
        %802 = vmatmul.mubr.f32.gmra.mrb[0].mxu0 %v641
        %v803 = vpop.f32.mrb[0].mxu0
        %v804 = vadd.f32 %v661, %v803
        %v805 = vpop.f32.mrb[0].mxu0
        %806 = vdwg.mxu0
        %807 = vst [vmem:[%s218] sm:$0xff] %v729
        %808 = vst [vmem:[%s218 + $0x8] sm:$0xff] %v734
        %809 = vst [vmem:[%s218 + $0x10] sm:$0xff] %v739
        %810 = vst [vmem:[%s218 + $0x18] sm:$0xff] %v744
        %811 = vst [vmem:[%s218 + $0x20] sm:$0xff] %v749
        %812 = vst [vmem:[%s218 + $0x28] sm:$0xff] %v754
        %813 = vst [vmem:[%s218 + $0x30] sm:$0xff] %v759
        %814 = vst [vmem:[%s218 + $0x38] sm:$0xff] %v764
        %815 = vst [vmem:[%s218 + $0x40] sm:$0xff] %v769
        %816 = vst [vmem:[%s218 + $0x48] sm:$0xff] %v774
        %817 = vst [vmem:[%s218 + $0x50] sm:$0xff] %v779
        %818 = vst [vmem:[%s218 + $0x58] sm:$0xff] %v784
        %819 = vst [vmem:[%s218 + $0x60] sm:$0xff] %v789
        %820 = vst [vmem:[%s218 + $0x68] sm:$0xff] %v794
        %821 = vst [vmem:[%s218 + $0x70] sm:$0xff] %v799
        %822 = vst [vmem:[%s218 + $0x78] sm:$0xff] %v804
        %s823 = sand.u32 %s137, 1
        %s824 = scalar_lea.sflag [#allocation3], %s823
        %s825 = sand.u32 %s137, 1
        %s826 = smul.addr %s825, 128
        %s827 = scalar_lea.vmem [#allocation2], %s826
        // Predicated region
        $region41: #{tpu_custom_call.1} parent=39 // pred_check
          %p828 = pneg %p147
        $region42: #{tpu_custom_call.1} parent=39 // pred_check_branch
          %830 = sbr.rel (%p828) target = $region44
        $region43: #{tpu_custom_call.1} parent=39 // pred_region
          %s831 = smul.u32 16, %s19
          %s833 = ssub.s32 2048, 2048
          %834 = vsyncadd %s824, %s833
          %s835 = smul.addr %s831, 128
          %s836 = scalar_lea.hbm %s5, %s835
          %s837 = sshll.u32 %s827, 4
          %s838 = int_to_ptr.vmem [resolvable:$true] %s837
          %843 = dma.vmem_to_hbm [thread:$0]  %s838, 2048, %s836, %s824, 128, 128, 8
        $region44: #{tpu_custom_call.1} parent=39 // pred_fallthru
          _
      $region40: #{tpu_custom_call.1} parent=5 // pred_fallthru
        _
      %p844 = scmp.le.s32.totalorder 2, %s14
      // Predicated region
      $region45: #{tpu_custom_call.1} parent=5 // pred_check
        %p845 = pneg %p844
      $region46: #{tpu_custom_call.1} parent=5 // pred_check_branch
        %847 = sbr.rel (%p845) target = $region48
      $region47: #{tpu_custom_call.1} parent=5 // pred_region
        %s848 = ssub.s32 %s14, 2
        // Predicated region
        $region49: #{tpu_custom_call.1} parent=47 // pred_check
          %p849 = pneg %p153
        $region50: #{tpu_custom_call.1} parent=47 // pred_check_branch
          %851 = sbr.rel (%p849) target = $region52
        $region51: #{tpu_custom_call.1} parent=47 // pred_region
          %s852 = sand.u32 %s138, 1
          %s853 = scalar_lea.sflag [#allocation3], %s852
          %s854 = sand.u32 %s138, 1
          %s855 = smul.addr %s854, 128
          %s856 = scalar_lea.vmem [#allocation2], %s855
          %857 = dma.done %s853, 2048
        $region52: #{tpu_custom_call.1} parent=47 // pred_fallthru
          _
      $region48: #{tpu_custom_call.1} parent=5 // pred_fallthru
        _
    $region6: #{tpu_custom_call.1} parent=1 // loop_footer
      %s18 = sadd.s32 1, %s14
    $region7: #{tpu_custom_call.1} parent=1 // loop_footer_branch
      %13 = sbr.rel target = $region3
    $region8: #{tpu_custom_call.1} parent=1 // loop_exit
      _
    %858 = vsyncpa [#allocation3], 1
    %s859 = scalar_lea.sflag [#allocation3], 1
    %860 = vsyncpa %s859, 1

</llo_original>
